<compile_context>
chip_gen: v7x
topology: tpu7x:2x2x1
jax: 0.10.0
libtpu: 0.0.40
codegen_flags: <defaults>
</compile_context>

<pallas_src>
import math
from math import ceil, floor

import numpy as np

import jax
import jax.numpy as jnp
from jax import lax
from jax.experimental import pallas as pl
from jax.experimental.pallas import tpu as pltpu


def _round_up(v, m):
    return ((v + m - 1) // m) * m


# ----------------------------------------------------------------------------
# Pallas kernel factory: fused feat-conv + abs + adaptive-avg-pool, and
# pass-conv, for TB batch rows per grid step (computed in CB-row chunks).
# ----------------------------------------------------------------------------
def _make_wavelet_kernel(*, C, Kf, Sf, Kp, Sp, Lf, Lp, Cout_p, TB, CB, shared):
    n_chunks = TB // CB
    assert n_chunks * CB == TB

    def _conv_chunk(x_ref, c0, K, S, Lout, weights, biases):
        """Unrolled VPU conv over one CB-row batch chunk.

        x_ref is the phase-decomposed block (C*S, TB, M); tap t = q*S + r of
        channel c at output position m reads X[c*S + r, :, m + q], so each tap
        is a contiguous lane slice of a dense (CB, M) row load.
        Returns len(weights) accumulators of shape (CB, Lout), f32.
        """
        n_out = len(weights)
        accs = [jnp.zeros((CB, Lout), jnp.float32) + biases[o] for o in range(n_out)]
        for c in range(C):
            for r in range(S):
                n_q = (K - r + S - 1) // S          # taps t = q*S + r with t < K
                if n_q <= 0:
                    continue
                row = x_ref[c * S + r, c0:c0 + CB, :].astype(jnp.float32)   # (CB, M)
                for q in range(n_q):
                    t = q * S + r
                    sl = row[:, q:q + Lout]                                  # (CB, Lout)
                    for o in range(n_out):
                        accs[o] = accs[o] + sl * weights[o][c][t]
        return accs

    def _body(xf_ref, xp_ref, fw_ref, fb_ref, pool_ref, pw_ref, pb_ref,
              feat_out_ref, pass_out_ref):
        # Hoist all scalar (SMEM) parameter reads out of the chunk loop.
        fw = [[fw_ref[c, t] for t in range(Kf)] for c in range(C)]
        fb = fb_ref[0]
        pw = [[[pw_ref[co, c * Kp + t] for t in range(Kp)] for c in range(C)]
              for co in range(Cout_p)]
        pb = [pb_ref[co] for co in range(Cout_p)]
        pool = pool_ref[...]                                 # (Lf, F), VMEM-resident

        for ci in range(n_chunks):
            c0 = ci * CB
            if shared:
                # One pass over the input rows feeds feat + all pass channels.
                accs = _conv_chunk(xf_ref, c0, Kf, Sf, Lf, [fw] + pw, [fb] + pb)
                acc_f, accs_p = accs[0], accs[1:]
            else:
                (acc_f,) = _conv_chunk(xf_ref, c0, Kf, Sf, Lf, [fw], [fb])
                accs_p = _conv_chunk(xp_ref, c0, Kp, Sp, Lp, pw, pb)

            # ---- feat path: LeakyReLU(-1) == abs -> adaptive avg pool ----
            # (CB x Lf x F dot is tiny; f32 kept for exactness vs. reference)
            act_f = jnp.abs(acc_f)                                           # (CB, Lf)
            feat = jnp.dot(act_f, pool, preferred_element_type=jnp.float32)  # (CB, F)
            # feat output layout is (features, B): batch rides the lane axis.
            feat_out_ref[:, c0:c0 + CB] = feat.T

            # ---- pass path (dropout == identity at inference) ----
            # pass output layout is (Cout_p, B, Lp): dense (CB, Lp) stores.
            for co in range(Cout_p):
                pass_out_ref[co, c0:c0 + CB, :] = accs_p[co]

    if shared:
        def kernel(x_ref, fw_ref, fb_ref, pool_ref, pw_ref, pb_ref,
                   feat_out_ref, pass_out_ref):
            _body(x_ref, x_ref, fw_ref, fb_ref, pool_ref, pw_ref, pb_ref,
                  feat_out_ref, pass_out_ref)
    else:
        def kernel(xf_ref, xp_ref, fw_ref, fb_ref, pool_ref, pw_ref, pb_ref,
                   feat_out_ref, pass_out_ref):
            _body(xf_ref, xp_ref, fw_ref, fb_ref, pool_ref, pw_ref, pb_ref,
                  feat_out_ref, pass_out_ref)
    return kernel


# ----------------------------------------------------------------------------
# Glue helpers (plain JAX / Python): padding + phase decomposition, pool matrix.
# ----------------------------------------------------------------------------
def _phase_decompose(x, k, s):
    # PyTorch: ConstantPad1d((max(k - s, 0), k - 1), 0) then Conv1d(k, stride=s).
    # Build X with X[c*s + r, b, m] == x_pad[b, c, m*s + r].  Channel-phase is
    # the leading (untiled) axis, so every per-tap kernel read is a dense
    # (TB, M) slab with zero sublane padding.  Same total bytes as x_pad.
    B, C, L = x.shape
    left = max(k - s, 0)
    right = k - 1
    Lpad = L + left + right
    Lout = (Lpad - k) // s + 1
    M = Lout + (k - 1) // s             # phase length actually read by the conv
    target = M * s
    pad_right = right + max(target - Lpad, 0)
    xe = jnp.pad(x, ((0, 0), (0, 0), (left, pad_right)))[:, :, :target]
    X = xe.reshape(B, C, M, s).transpose(1, 3, 0, 2).reshape(C * s, B, M)
    return X, Lout, M


def _adaptive_avg_pool_matrix(in_len, out_len, dtype=jnp.float32):
    # PyTorch AdaptiveAvgPool1d: bin i averages x[floor(i*L/F) : ceil((i+1)*L/F)]
    P = np.zeros((in_len, out_len), dtype=np.float32)
    for i in range(out_len):
        s = floor(i * in_len / out_len)
        e = ceil((i + 1) * in_len / out_len)
        P[s:e, i] = 1.0 / (e - s)
    return jnp.asarray(P, dtype=dtype)


# ----------------------------------------------------------------------------
# Wrapper: parameter setup + pallas_call.
# ----------------------------------------------------------------------------
def wavelet_convolution_forward(
    x,                      # (B, C, L) float32
    feat_w, feat_b,         # (1, C, Kf), (1,)
    pass_w, pass_b,         # (Cout_p, C, Kp), (Cout_p,)
    feat_kernel_size, feat_stride,
    pass_kernel_size, pass_stride,
    features,
    batch_tile=128,
    input_dtype=jnp.float32,    # jnp.bfloat16 halves HBM bytes on v6e/v7x
):
    B, C, L = x.shape
    Cout_p = pass_w.shape[0]
    Kf, Sf = int(feat_kernel_size), int(feat_stride)
    Kp, Sp = int(pass_kernel_size), int(pass_stride)

    # Dedup: both conv paths read the same phase-decomposed tensor when their
    # (kernel, stride) — and hence their ConstantPad1d — match.
    shared = (Kf == Kp) and (Sf == Sp)

    # Cast BEFORE the pad/phase-decompose pre-pass so it moves fewer HBM bytes
    # when input_dtype is bf16.  (Note: bf16 needs a looser reference tolerance.)
    x = x.astype(input_dtype)
    Xf, Lf, Mf = _phase_decompose(x, Kf, Sf)
    if shared:
        Xp, Lp, Mp = None, Lf, Mf
    else:
        Xp, Lp, Mp = _phase_decompose(x, Kp, Sp)

    # --- batch tiling: fat DMA blocks, small compute chunks inside the body ---
    if B <= batch_tile:
        Bp = _round_up(max(B, 1), 8)
        TB = Bp                                     # single block == full array
    else:
        TB = max(128, (batch_tile // 128) * 128)    # lane-dense feat stores need TB % 128 == 0
        # keep >= 4 grid steps when possible so both v7x TensorCores pipeline
        while TB > 128 and -(-B // TB) < 4:
            TB -= 128
        Bp = _round_up(B, TB)
    CB = 16 if TB % 16 == 0 else (8 if TB % 8 == 0 else TB)   # compute chunk rows

    if Bp != B:
        Xf = jnp.pad(Xf, ((0, 0), (0, Bp - B), (0, 0)))
        if not shared:
            Xp = jnp.pad(Xp, ((0, 0), (0, Bp - B), (0, 0)))
    grid = (Bp // TB,)

    # Scalar parameters live in SMEM (used as tap multipliers on the VPU).
    fw = feat_w.reshape(C, Kf).astype(jnp.float32)
    fb = feat_b.reshape(1).astype(jnp.float32)
    pw = pass_w.reshape(Cout_p, C * Kp).astype(jnp.float32)
    pb = pass_b.reshape(Cout_p).astype(jnp.float32)
    pool_mat = _adaptive_avg_pool_matrix(Lf, features)           # (Lf, F)

    smem = pl.BlockSpec(memory_space=pltpu.MemorySpace.SMEM)
    x_specs = [pl.BlockSpec((C * Sf, TB, Mf), lambda b: (0, b, 0))]
    inputs = [Xf]
    if not shared:
        x_specs.append(pl.BlockSpec((C * Sp, TB, Mp), lambda b: (0, b, 0)))
        inputs.append(Xp)
    in_specs = x_specs + [
        smem,                                                    # feat weight
        smem,                                                    # feat bias
        pl.BlockSpec((Lf, features), lambda b: (0, 0)),          # pool matrix (VMEM resident)
        smem,                                                    # pass weight
        smem,                                                    # pass bias
    ]
    inputs += [fw, fb, pool_mat, pw, pb]

    kernel = _make_wavelet_kernel(C=C, Kf=Kf, Sf=Sf, Kp=Kp, Sp=Sp,
                                  Lf=Lf, Lp=Lp, Cout_p=Cout_p, TB=TB, CB=CB,
                                  shared=shared)

    # Explicit VMEM budget (double-buffered inputs/outputs, tile-padded) so the
    # kernel stays comfortably inside v7x's 64 MiB while not constraining v5e/v6e.
    ib = jnp.dtype(input_dtype).itemsize
    est = 2 * (C * Sf) * _round_up(TB, 8) * _round_up(Mf, 128) * ib
    if not shared:
        est += 2 * (C * Sp) * _round_up(TB, 8) * _round_up(Mp, 128) * ib
    est += _round_up(Lf, 8) * _round_up(features, 128) * 4
    est += 2 * _round_up(features, 8) * _round_up(TB, 128) * 4
    est += 2 * Cout_p * _round_up(TB, 8) * _round_up(Lp, 128) * 4
    vmem_limit = int(min(max(est + (8 << 20), 32 << 20), 100 << 20))

    feat_out, pass_out = pl.pallas_call(
        kernel,
        out_shape=(
            jax.ShapeDtypeStruct((features, Bp), jnp.float32),      # lane-dense feat
            jax.ShapeDtypeStruct((Cout_p, Bp, Lp), jnp.float32),    # dense pass slab
        ),
        grid_spec=pltpu.PrefetchScalarGridSpec(
            num_scalar_prefetch=0,
            grid=grid,
            in_specs=in_specs,
            out_specs=[
                pl.BlockSpec((features, TB), lambda b: (0, b)),
                pl.BlockSpec((Cout_p, TB, Lp), lambda b: (0, b, 0)),
            ],
        ),
        compiler_params=pltpu.CompilerParams(
            dimension_semantics=("parallel",),
            vmem_limit_bytes=vmem_limit,
        ),
    )(*inputs)

    # Back to PyTorch layout (layout plumbing only): (B, features), (B, Cout_p, Lp).
    feat_out = feat_out.T[:B]
    pass_out = jnp.transpose(pass_out, (1, 0, 2))[:B]
    return feat_out, pass_out


# ----------------------------------------------------------------------------
# Pure-JAX reference (for correctness sanity check).
# ----------------------------------------------------------------------------
def _pad_1d(x, kernel_size, stride):
    left = max(kernel_size - stride, 0)
    right = kernel_size - 1
    return jnp.pad(x, ((0, 0), (0, 0), (left, right)))


def _reference_forward(x, feat_w, feat_b, pass_w, pass_b,
                       kf, sf, kp, sp, features):
    def conv1d(xin, w, b, k, s):
        xpad = _pad_1d(xin, k, s)
        out = lax.conv_general_dilated(
            xpad, w, window_strides=(s,), padding="VALID",
            dimension_numbers=("NCH", "OIH", "NCH"))
        return out + b[None, :, None]

    f = conv1d(x, feat_w, feat_b, kf, sf)          # (B, 1, Lf)
    f = jnp.abs(f)                                  # LeakyReLU(-1)
    Lf = f.shape[-1]
    P = _adaptive_avg_pool_matrix(Lf, features)
    feat = jnp.einsum("bol,lf->bf", f, P)           # adaptive avg pool, view(B, F)
    p = conv1d(x, pass_w, pass_b, kp, sp)           # (B, Cout_p, Lp); dropout=identity
    return feat, p


if __name__ == "__main__":
    # x has shape (batch*neural_channels, in_channels, n_samples)
    B, C, L = 16, 2, 256
    feat_kernel_size, feat_stride = 8, 2
    pass_kernel_size, pass_stride = 8, 2
    feat_out_channels = 1           # module only supports 1
    pass_out_channels = 3
    features = 8

    key = jax.random.PRNGKey(0)
    kx, kfw, kfb, kpw, kpb = jax.random.split(key, 5)

    x = jax.random.normal(kx, (B, C, L), dtype=jnp.float32)

    fan_f = C * feat_kernel_size
    fan_p = C * pass_kernel_size
    feat_w = jax.random.normal(kfw, (feat_out_channels, C, feat_kernel_size),
                               dtype=jnp.float32) / math.sqrt(fan_f)
    feat_b = jax.random.normal(kfb, (feat_out_channels,), dtype=jnp.float32) * 0.1
    pass_w = jax.random.normal(kpw, (pass_out_channels, C, pass_kernel_size),
                               dtype=jnp.float32) / math.sqrt(fan_p)
    pass_b = jax.random.normal(kpb, (pass_out_channels,), dtype=jnp.float32) * 0.1

    fwd = jax.jit(
        wavelet_convolution_forward,
        static_argnames=("feat_kernel_size", "feat_stride",
                         "pass_kernel_size", "pass_stride",
                         "features", "batch_tile", "input_dtype"),
    )
    feat_out, pass_out = fwd(
        x, feat_w, feat_b, pass_w, pass_b,
        feat_kernel_size=feat_kernel_size, feat_stride=feat_stride,
        pass_kernel_size=pass_kernel_size, pass_stride=pass_stride,
        features=features, batch_tile=128,
    )
    feat_out = jax.block_until_ready(feat_out)
    pass_out = jax.block_until_ready(pass_out)

    # Sanity check against pure-JAX reference.
    feat_ref, pass_ref = _reference_forward(
        x, feat_w, feat_b, pass_w, pass_b,
        feat_kernel_size, feat_stride, pass_kernel_size, pass_stride, features)
    assert feat_out.shape == (B, features)
    assert pass_out.shape == pass_ref.shape
    assert jnp.allclose(feat_out, feat_ref, atol=1e-4, rtol=1e-4)
    assert jnp.allclose(pass_out, pass_ref, atol=1e-4, rtol=1e-4)

    print("KERNEL_OK")
</pallas_src>

<mosaic_0001>
module attributes {stable_mosaic.version = 11 : i64} {
  func.func @kernel(%arg0: i32, %arg1: memref<4x16x134xf32, #tpu.memory_space<vmem>>, %arg2: memref<2x8xf32, #tpu.memory_space<smem>>, %arg3: memref<1xf32, #tpu.memory_space<smem>>, %arg4: memref<131x8xf32, #tpu.memory_space<vmem>>, %arg5: memref<3x16xf32, #tpu.memory_space<smem>>, %arg6: memref<3xf32, #tpu.memory_space<smem>>, %arg7: memref<8x16xf32, #tpu.memory_space<vmem>>, %arg8: memref<3x16x131xf32, #tpu.memory_space<vmem>>) attributes {dimension_semantics = [#tpu.dimension_semantics<parallel>], iteration_bounds = array<i64: 1>, scalar_prefetch = 0 : i64, scratch_operands = 0 : i64, tpu.core_type = #tpu.core_type<tc>, window_params = [{transform_indices = @transform_0, window_bounds = array<i64: 4, 16, 134>}, {transform_indices = @transform_1, window_bounds = array<i64: 2, 8>}, {transform_indices = @transform_2, window_bounds = array<i64: 1>}, {pipeline_mode = #tpu.pipeline_mode<synchronous>, transform_indices = @transform_3, window_bounds = array<i64: 131, 8>}, {transform_indices = @transform_4, window_bounds = array<i64: 3, 16>}, {transform_indices = @transform_5, window_bounds = array<i64: 3>}, {transform_indices = @transform_6, window_bounds = array<i64: 8, 16>}, {transform_indices = @transform_7, window_bounds = array<i64: 3, 16, 131>}]} {
    %c0 = arith.constant 0 : index
    %c0_0 = arith.constant 0 : index
    %0 = memref.load %arg2[%c0, %c0_0] : memref<2x8xf32, #tpu.memory_space<smem>>
    %c0_1 = arith.constant 0 : index
    %c1 = arith.constant 1 : index
    %1 = memref.load %arg2[%c0_1, %c1] : memref<2x8xf32, #tpu.memory_space<smem>>
    %c0_2 = arith.constant 0 : index
    %c2 = arith.constant 2 : index
    %2 = memref.load %arg2[%c0_2, %c2] : memref<2x8xf32, #tpu.memory_space<smem>>
    %c0_3 = arith.constant 0 : index
    %c3 = arith.constant 3 : index
    %3 = memref.load %arg2[%c0_3, %c3] : memref<2x8xf32, #tpu.memory_space<smem>>
    %c0_4 = arith.constant 0 : index
    %c4 = arith.constant 4 : index
    %4 = memref.load %arg2[%c0_4, %c4] : memref<2x8xf32, #tpu.memory_space<smem>>
    %c0_5 = arith.constant 0 : index
    %c5 = arith.constant 5 : index
    %5 = memref.load %arg2[%c0_5, %c5] : memref<2x8xf32, #tpu.memory_space<smem>>
    %c0_6 = arith.constant 0 : index
    %c6 = arith.constant 6 : index
    %6 = memref.load %arg2[%c0_6, %c6] : memref<2x8xf32, #tpu.memory_space<smem>>
    %c0_7 = arith.constant 0 : index
    %c7 = arith.constant 7 : index
    %7 = memref.load %arg2[%c0_7, %c7] : memref<2x8xf32, #tpu.memory_space<smem>>
    %c1_8 = arith.constant 1 : index
    %c0_9 = arith.constant 0 : index
    %8 = memref.load %arg2[%c1_8, %c0_9] : memref<2x8xf32, #tpu.memory_space<smem>>
    %c1_10 = arith.constant 1 : index
    %c1_11 = arith.constant 1 : index
    %9 = memref.load %arg2[%c1_10, %c1_11] : memref<2x8xf32, #tpu.memory_space<smem>>
    %c1_12 = arith.constant 1 : index
    %c2_13 = arith.constant 2 : index
    %10 = memref.load %arg2[%c1_12, %c2_13] : memref<2x8xf32, #tpu.memory_space<smem>>
    %c1_14 = arith.constant 1 : index
    %c3_15 = arith.constant 3 : index
    %11 = memref.load %arg2[%c1_14, %c3_15] : memref<2x8xf32, #tpu.memory_space<smem>>
    %c1_16 = arith.constant 1 : index
    %c4_17 = arith.constant 4 : index
    %12 = memref.load %arg2[%c1_16, %c4_17] : memref<2x8xf32, #tpu.memory_space<smem>>
    %c1_18 = arith.constant 1 : index
    %c5_19 = arith.constant 5 : index
    %13 = memref.load %arg2[%c1_18, %c5_19] : memref<2x8xf32, #tpu.memory_space<smem>>
    %c1_20 = arith.constant 1 : index
    %c6_21 = arith.constant 6 : index
    %14 = memref.load %arg2[%c1_20, %c6_21] : memref<2x8xf32, #tpu.memory_space<smem>>
    %c1_22 = arith.constant 1 : index
    %c7_23 = arith.constant 7 : index
    %15 = memref.load %arg2[%c1_22, %c7_23] : memref<2x8xf32, #tpu.memory_space<smem>>
    %c0_24 = arith.constant 0 : index
    %16 = memref.load %arg3[%c0_24] : memref<1xf32, #tpu.memory_space<smem>>
    %c0_25 = arith.constant 0 : index
    %c0_26 = arith.constant 0 : index
    %17 = memref.load %arg5[%c0_25, %c0_26] : memref<3x16xf32, #tpu.memory_space<smem>>
    %c0_27 = arith.constant 0 : index
    %c1_28 = arith.constant 1 : index
    %18 = memref.load %arg5[%c0_27, %c1_28] : memref<3x16xf32, #tpu.memory_space<smem>>
    %c0_29 = arith.constant 0 : index
    %c2_30 = arith.constant 2 : index
    %19 = memref.load %arg5[%c0_29, %c2_30] : memref<3x16xf32, #tpu.memory_space<smem>>
    %c0_31 = arith.constant 0 : index
    %c3_32 = arith.constant 3 : index
    %20 = memref.load %arg5[%c0_31, %c3_32] : memref<3x16xf32, #tpu.memory_space<smem>>
    %c0_33 = arith.constant 0 : index
    %c4_34 = arith.constant 4 : index
    %21 = memref.load %arg5[%c0_33, %c4_34] : memref<3x16xf32, #tpu.memory_space<smem>>
    %c0_35 = arith.constant 0 : index
    %c5_36 = arith.constant 5 : index
    %22 = memref.load %arg5[%c0_35, %c5_36] : memref<3x16xf32, #tpu.memory_space<smem>>
    %c0_37 = arith.constant 0 : index
    %c6_38 = arith.constant 6 : index
    %23 = memref.load %arg5[%c0_37, %c6_38] : memref<3x16xf32, #tpu.memory_space<smem>>
    %c0_39 = arith.constant 0 : index
    %c7_40 = arith.constant 7 : index
    %24 = memref.load %arg5[%c0_39, %c7_40] : memref<3x16xf32, #tpu.memory_space<smem>>
    %c0_41 = arith.constant 0 : index
    %c8 = arith.constant 8 : index
    %25 = memref.load %arg5[%c0_41, %c8] : memref<3x16xf32, #tpu.memory_space<smem>>
    %c0_42 = arith.constant 0 : index
    %c9 = arith.constant 9 : index
    %26 = memref.load %arg5[%c0_42, %c9] : memref<3x16xf32, #tpu.memory_space<smem>>
    %c0_43 = arith.constant 0 : index
    %c10 = arith.constant 10 : index
    %27 = memref.load %arg5[%c0_43, %c10] : memref<3x16xf32, #tpu.memory_space<smem>>
    %c0_44 = arith.constant 0 : index
    %c11 = arith.constant 11 : index
    %28 = memref.load %arg5[%c0_44, %c11] : memref<3x16xf32, #tpu.memory_space<smem>>
    %c0_45 = arith.constant 0 : index
    %c12 = arith.constant 12 : index
    %29 = memref.load %arg5[%c0_45, %c12] : memref<3x16xf32, #tpu.memory_space<smem>>
    %c0_46 = arith.constant 0 : index
    %c13 = arith.constant 13 : index
    %30 = memref.load %arg5[%c0_46, %c13] : memref<3x16xf32, #tpu.memory_space<smem>>
    %c0_47 = arith.constant 0 : index
    %c14 = arith.constant 14 : index
    %31 = memref.load %arg5[%c0_47, %c14] : memref<3x16xf32, #tpu.memory_space<smem>>
    %c0_48 = arith.constant 0 : index
    %c15 = arith.constant 15 : index
    %32 = memref.load %arg5[%c0_48, %c15] : memref<3x16xf32, #tpu.memory_space<smem>>
    %c1_49 = arith.constant 1 : index
    %c0_50 = arith.constant 0 : index
    %33 = memref.load %arg5[%c1_49, %c0_50] : memref<3x16xf32, #tpu.memory_space<smem>>
    %c1_51 = arith.constant 1 : index
    %c1_52 = arith.constant 1 : index
    %34 = memref.load %arg5[%c1_51, %c1_52] : memref<3x16xf32, #tpu.memory_space<smem>>
    %c1_53 = arith.constant 1 : index
    %c2_54 = arith.constant 2 : index
    %35 = memref.load %arg5[%c1_53, %c2_54] : memref<3x16xf32, #tpu.memory_space<smem>>
    %c1_55 = arith.constant 1 : index
    %c3_56 = arith.constant 3 : index
    %36 = memref.load %arg5[%c1_55, %c3_56] : memref<3x16xf32, #tpu.memory_space<smem>>
    %c1_57 = arith.constant 1 : index
    %c4_58 = arith.constant 4 : index
    %37 = memref.load %arg5[%c1_57, %c4_58] : memref<3x16xf32, #tpu.memory_space<smem>>
    %c1_59 = arith.constant 1 : index
    %c5_60 = arith.constant 5 : index
    %38 = memref.load %arg5[%c1_59, %c5_60] : memref<3x16xf32, #tpu.memory_space<smem>>
    %c1_61 = arith.constant 1 : index
    %c6_62 = arith.constant 6 : index
    %39 = memref.load %arg5[%c1_61, %c6_62] : memref<3x16xf32, #tpu.memory_space<smem>>
    %c1_63 = arith.constant 1 : index
    %c7_64 = arith.constant 7 : index
    %40 = memref.load %arg5[%c1_63, %c7_64] : memref<3x16xf32, #tpu.memory_space<smem>>
    %c1_65 = arith.constant 1 : index
    %c8_66 = arith.constant 8 : index
    %41 = memref.load %arg5[%c1_65, %c8_66] : memref<3x16xf32, #tpu.memory_space<smem>>
    %c1_67 = arith.constant 1 : index
    %c9_68 = arith.constant 9 : index
    %42 = memref.load %arg5[%c1_67, %c9_68] : memref<3x16xf32, #tpu.memory_space<smem>>
    %c1_69 = arith.constant 1 : index
    %c10_70 = arith.constant 10 : index
    %43 = memref.load %arg5[%c1_69, %c10_70] : memref<3x16xf32, #tpu.memory_space<smem>>
    %c1_71 = arith.constant 1 : index
    %c11_72 = arith.constant 11 : index
    %44 = memref.load %arg5[%c1_71, %c11_72] : memref<3x16xf32, #tpu.memory_space<smem>>
    %c1_73 = arith.constant 1 : index
    %c12_74 = arith.constant 12 : index
    %45 = memref.load %arg5[%c1_73, %c12_74] : memref<3x16xf32, #tpu.memory_space<smem>>
    %c1_75 = arith.constant 1 : index
    %c13_76 = arith.constant 13 : index
    %46 = memref.load %arg5[%c1_75, %c13_76] : memref<3x16xf32, #tpu.memory_space<smem>>
    %c1_77 = arith.constant 1 : index
    %c14_78 = arith.constant 14 : index
    %47 = memref.load %arg5[%c1_77, %c14_78] : memref<3x16xf32, #tpu.memory_space<smem>>
    %c1_79 = arith.constant 1 : index
    %c15_80 = arith.constant 15 : index
    %48 = memref.load %arg5[%c1_79, %c15_80] : memref<3x16xf32, #tpu.memory_space<smem>>
    %c2_81 = arith.constant 2 : index
    %c0_82 = arith.constant 0 : index
    %49 = memref.load %arg5[%c2_81, %c0_82] : memref<3x16xf32, #tpu.memory_space<smem>>
    %c2_83 = arith.constant 2 : index
    %c1_84 = arith.constant 1 : index
    %50 = memref.load %arg5[%c2_83, %c1_84] : memref<3x16xf32, #tpu.memory_space<smem>>
    %c2_85 = arith.constant 2 : index
    %c2_86 = arith.constant 2 : index
    %51 = memref.load %arg5[%c2_85, %c2_86] : memref<3x16xf32, #tpu.memory_space<smem>>
    %c2_87 = arith.constant 2 : index
    %c3_88 = arith.constant 3 : index
    %52 = memref.load %arg5[%c2_87, %c3_88] : memref<3x16xf32, #tpu.memory_space<smem>>
    %c2_89 = arith.constant 2 : index
    %c4_90 = arith.constant 4 : index
    %53 = memref.load %arg5[%c2_89, %c4_90] : memref<3x16xf32, #tpu.memory_space<smem>>
    %c2_91 = arith.constant 2 : index
    %c5_92 = arith.constant 5 : index
    %54 = memref.load %arg5[%c2_91, %c5_92] : memref<3x16xf32, #tpu.memory_space<smem>>
    %c2_93 = arith.constant 2 : index
    %c6_94 = arith.constant 6 : index
    %55 = memref.load %arg5[%c2_93, %c6_94] : memref<3x16xf32, #tpu.memory_space<smem>>
    %c2_95 = arith.constant 2 : index
    %c7_96 = arith.constant 7 : index
    %56 = memref.load %arg5[%c2_95, %c7_96] : memref<3x16xf32, #tpu.memory_space<smem>>
    %c2_97 = arith.constant 2 : index
    %c8_98 = arith.constant 8 : index
    %57 = memref.load %arg5[%c2_97, %c8_98] : memref<3x16xf32, #tpu.memory_space<smem>>
    %c2_99 = arith.constant 2 : index
    %c9_100 = arith.constant 9 : index
    %58 = memref.load %arg5[%c2_99, %c9_100] : memref<3x16xf32, #tpu.memory_space<smem>>
    %c2_101 = arith.constant 2 : index
    %c10_102 = arith.constant 10 : index
    %59 = memref.load %arg5[%c2_101, %c10_102] : memref<3x16xf32, #tpu.memory_space<smem>>
    %c2_103 = arith.constant 2 : index
    %c11_104 = arith.constant 11 : index
    %60 = memref.load %arg5[%c2_103, %c11_104] : memref<3x16xf32, #tpu.memory_space<smem>>
    %c2_105 = arith.constant 2 : index
    %c12_106 = arith.constant 12 : index
    %61 = memref.load %arg5[%c2_105, %c12_106] : memref<3x16xf32, #tpu.memory_space<smem>>
    %c2_107 = arith.constant 2 : index
    %c13_108 = arith.constant 13 : index
    %62 = memref.load %arg5[%c2_107, %c13_108] : memref<3x16xf32, #tpu.memory_space<smem>>
    %c2_109 = arith.constant 2 : index
    %c14_110 = arith.constant 14 : index
    %63 = memref.load %arg5[%c2_109, %c14_110] : memref<3x16xf32, #tpu.memory_space<smem>>
    %c2_111 = arith.constant 2 : index
    %c15_112 = arith.constant 15 : index
    %64 = memref.load %arg5[%c2_111, %c15_112] : memref<3x16xf32, #tpu.memory_space<smem>>
    %c0_113 = arith.constant 0 : index
    %65 = memref.load %arg6[%c0_113] : memref<3xf32, #tpu.memory_space<smem>>
    %c1_114 = arith.constant 1 : index
    %66 = memref.load %arg6[%c1_114] : memref<3xf32, #tpu.memory_space<smem>>
    %c2_115 = arith.constant 2 : index
    %67 = memref.load %arg6[%c2_115] : memref<3xf32, #tpu.memory_space<smem>>
    %c0_116 = arith.constant 0 : index
    %c0_117 = arith.constant 0 : index
    %68 = vector.load %arg4[%c0_116, %c0_117] : memref<131x8xf32, #tpu.memory_space<vmem>>, vector<131x8xf32>
    %cst = arith.constant 0.000000e+00 : f32
    %69 = vector.broadcast %cst : f32 to vector<16x131xf32>
    %70 = vector.broadcast %16 : f32 to vector<16x131xf32>
    %71 = arith.addf %69, %70 : vector<16x131xf32>
    %cst_118 = arith.constant 0.000000e+00 : f32
    %72 = vector.broadcast %cst_118 : f32 to vector<16x131xf32>
    %73 = vector.broadcast %65 : f32 to vector<16x131xf32>
    %74 = arith.addf %72, %73 : vector<16x131xf32>
    %cst_119 = arith.constant 0.000000e+00 : f32
    %75 = vector.broadcast %cst_119 : f32 to vector<16x131xf32>
    %76 = vector.broadcast %66 : f32 to vector<16x131xf32>
    %77 = arith.addf %75, %76 : vector<16x131xf32>
    %cst_120 = arith.constant 0.000000e+00 : f32
    %78 = vector.broadcast %cst_120 : f32 to vector<16x131xf32>
    %79 = vector.broadcast %67 : f32 to vector<16x131xf32>
    %80 = arith.addf %78, %79 : vector<16x131xf32>
    %c0_121 = arith.constant 0 : index
    %c0_122 = arith.constant 0 : index
    %c0_123 = arith.constant 0 : index
    %81 = vector.load %arg1[%c0_121, %c0_122, %c0_123] : memref<4x16x134xf32, #tpu.memory_space<vmem>>, vector<1x16x134xf32>
    %82 = vector.shape_cast %81 : vector<1x16x134xf32> to vector<16x134xf32>
    %83 = vector.extract_strided_slice %82 {offsets = [0, 0], sizes = [16, 131], strides = [1, 1]} : vector<16x134xf32> to vector<16x131xf32>
    %84 = vector.broadcast %0 : f32 to vector<16x131xf32>
    %85 = arith.mulf %83, %84 : vector<16x131xf32>
    %86 = arith.addf %71, %85 : vector<16x131xf32>
    %87 = vector.broadcast %17 : f32 to vector<16x131xf32>
    %88 = arith.mulf %83, %87 : vector<16x131xf32>
    %89 = arith.addf %74, %88 : vector<16x131xf32>
    %90 = vector.broadcast %33 : f32 to vector<16x131xf32>
    %91 = arith.mulf %83, %90 : vector<16x131xf32>
    %92 = arith.addf %77, %91 : vector<16x131xf32>
    %93 = vector.broadcast %49 : f32 to vector<16x131xf32>
    %94 = arith.mulf %83, %93 : vector<16x131xf32>
    %95 = arith.addf %80, %94 : vector<16x131xf32>
    %96 = vector.extract_strided_slice %82 {offsets = [0, 1], sizes = [16, 131], strides = [1, 1]} : vector<16x134xf32> to vector<16x131xf32>
    %97 = vector.broadcast %2 : f32 to vector<16x131xf32>
    %98 = arith.mulf %96, %97 : vector<16x131xf32>
    %99 = arith.addf %86, %98 : vector<16x131xf32>
    %100 = vector.broadcast %19 : f32 to vector<16x131xf32>
    %101 = arith.mulf %96, %100 : vector<16x131xf32>
    %102 = arith.addf %89, %101 : vector<16x131xf32>
    %103 = vector.broadcast %35 : f32 to vector<16x131xf32>
    %104 = arith.mulf %96, %103 : vector<16x131xf32>
    %105 = arith.addf %92, %104 : vector<16x131xf32>
    %106 = vector.broadcast %51 : f32 to vector<16x131xf32>
    %107 = arith.mulf %96, %106 : vector<16x131xf32>
    %108 = arith.addf %95, %107 : vector<16x131xf32>
    %109 = vector.extract_strided_slice %82 {offsets = [0, 2], sizes = [16, 131], strides = [1, 1]} : vector<16x134xf32> to vector<16x131xf32>
    %110 = vector.broadcast %4 : f32 to vector<16x131xf32>
    %111 = arith.mulf %109, %110 : vector<16x131xf32>
    %112 = arith.addf %99, %111 : vector<16x131xf32>
    %113 = vector.broadcast %21 : f32 to vector<16x131xf32>
    %114 = arith.mulf %109, %113 : vector<16x131xf32>
    %115 = arith.addf %102, %114 : vector<16x131xf32>
    %116 = vector.broadcast %37 : f32 to vector<16x131xf32>
    %117 = arith.mulf %109, %116 : vector<16x131xf32>
    %118 = arith.addf %105, %117 : vector<16x131xf32>
    %119 = vector.broadcast %53 : f32 to vector<16x131xf32>
    %120 = arith.mulf %109, %119 : vector<16x131xf32>
    %121 = arith.addf %108, %120 : vector<16x131xf32>
    %122 = vector.extract_strided_slice %82 {offsets = [0, 3], sizes = [16, 131], strides = [1, 1]} : vector<16x134xf32> to vector<16x131xf32>
    %123 = vector.broadcast %6 : f32 to vector<16x131xf32>
    %124 = arith.mulf %122, %123 : vector<16x131xf32>
    %125 = arith.addf %112, %124 : vector<16x131xf32>
    %126 = vector.broadcast %23 : f32 to vector<16x131xf32>
    %127 = arith.mulf %122, %126 : vector<16x131xf32>
    %128 = arith.addf %115, %127 : vector<16x131xf32>
    %129 = vector.broadcast %39 : f32 to vector<16x131xf32>
    %130 = arith.mulf %122, %129 : vector<16x131xf32>
    %131 = arith.addf %118, %130 : vector<16x131xf32>
    %132 = vector.broadcast %55 : f32 to vector<16x131xf32>
    %133 = arith.mulf %122, %132 : vector<16x131xf32>
    %134 = arith.addf %121, %133 : vector<16x131xf32>
    %c1_124 = arith.constant 1 : index
    %c0_125 = arith.constant 0 : index
    %c0_126 = arith.constant 0 : index
    %135 = vector.load %arg1[%c1_124, %c0_125, %c0_126] : memref<4x16x134xf32, #tpu.memory_space<vmem>>, vector<1x16x134xf32>
    %136 = vector.shape_cast %135 : vector<1x16x134xf32> to vector<16x134xf32>
    %137 = vector.extract_strided_slice %136 {offsets = [0, 0], sizes = [16, 131], strides = [1, 1]} : vector<16x134xf32> to vector<16x131xf32>
    %138 = vector.broadcast %1 : f32 to vector<16x131xf32>
    %139 = arith.mulf %137, %138 : vector<16x131xf32>
    %140 = arith.addf %125, %139 : vector<16x131xf32>
    %141 = vector.broadcast %18 : f32 to vector<16x131xf32>
    %142 = arith.mulf %137, %141 : vector<16x131xf32>
    %143 = arith.addf %128, %142 : vector<16x131xf32>
    %144 = vector.broadcast %34 : f32 to vector<16x131xf32>
    %145 = arith.mulf %137, %144 : vector<16x131xf32>
    %146 = arith.addf %131, %145 : vector<16x131xf32>
    %147 = vector.broadcast %50 : f32 to vector<16x131xf32>
    %148 = arith.mulf %137, %147 : vector<16x131xf32>
    %149 = arith.addf %134, %148 : vector<16x131xf32>
    %150 = vector.extract_strided_slice %136 {offsets = [0, 1], sizes = [16, 131], strides = [1, 1]} : vector<16x134xf32> to vector<16x131xf32>
    %151 = vector.broadcast %3 : f32 to vector<16x131xf32>
    %152 = arith.mulf %150, %151 : vector<16x131xf32>
    %153 = arith.addf %140, %152 : vector<16x131xf32>
    %154 = vector.broadcast %20 : f32 to vector<16x131xf32>
    %155 = arith.mulf %150, %154 : vector<16x131xf32>
    %156 = arith.addf %143, %155 : vector<16x131xf32>
    %157 = vector.broadcast %36 : f32 to vector<16x131xf32>
    %158 = arith.mulf %150, %157 : vector<16x131xf32>
    %159 = arith.addf %146, %158 : vector<16x131xf32>
    %160 = vector.broadcast %52 : f32 to vector<16x131xf32>
    %161 = arith.mulf %150, %160 : vector<16x131xf32>
    %162 = arith.addf %149, %161 : vector<16x131xf32>
    %163 = vector.extract_strided_slice %136 {offsets = [0, 2], sizes = [16, 131], strides = [1, 1]} : vector<16x134xf32> to vector<16x131xf32>
    %164 = vector.broadcast %5 : f32 to vector<16x131xf32>
    %165 = arith.mulf %163, %164 : vector<16x131xf32>
    %166 = arith.addf %153, %165 : vector<16x131xf32>
    %167 = vector.broadcast %22 : f32 to vector<16x131xf32>
    %168 = arith.mulf %163, %167 : vector<16x131xf32>
    %169 = arith.addf %156, %168 : vector<16x131xf32>
    %170 = vector.broadcast %38 : f32 to vector<16x131xf32>
    %171 = arith.mulf %163, %170 : vector<16x131xf32>
    %172 = arith.addf %159, %171 : vector<16x131xf32>
    %173 = vector.broadcast %54 : f32 to vector<16x131xf32>
    %174 = arith.mulf %163, %173 : vector<16x131xf32>
    %175 = arith.addf %162, %174 : vector<16x131xf32>
    %176 = vector.extract_strided_slice %136 {offsets = [0, 3], sizes = [16, 131], strides = [1, 1]} : vector<16x134xf32> to vector<16x131xf32>
    %177 = vector.broadcast %7 : f32 to vector<16x131xf32>
    %178 = arith.mulf %176, %177 : vector<16x131xf32>
    %179 = arith.addf %166, %178 : vector<16x131xf32>
    %180 = vector.broadcast %24 : f32 to vector<16x131xf32>
    %181 = arith.mulf %176, %180 : vector<16x131xf32>
    %182 = arith.addf %169, %181 : vector<16x131xf32>
    %183 = vector.broadcast %40 : f32 to vector<16x131xf32>
    %184 = arith.mulf %176, %183 : vector<16x131xf32>
    %185 = arith.addf %172, %184 : vector<16x131xf32>
    %186 = vector.broadcast %56 : f32 to vector<16x131xf32>
    %187 = arith.mulf %176, %186 : vector<16x131xf32>
    %188 = arith.addf %175, %187 : vector<16x131xf32>
    %c2_127 = arith.constant 2 : index
    %c0_128 = arith.constant 0 : index
    %c0_129 = arith.constant 0 : index
    %189 = vector.load %arg1[%c2_127, %c0_128, %c0_129] : memref<4x16x134xf32, #tpu.memory_space<vmem>>, vector<1x16x134xf32>
    %190 = vector.shape_cast %189 : vector<1x16x134xf32> to vector<16x134xf32>
    %191 = vector.extract_strided_slice %190 {offsets = [0, 0], sizes = [16, 131], strides = [1, 1]} : vector<16x134xf32> to vector<16x131xf32>
    %192 = vector.broadcast %8 : f32 to vector<16x131xf32>
    %193 = arith.mulf %191, %192 : vector<16x131xf32>
    %194 = arith.addf %179, %193 : vector<16x131xf32>
    %195 = vector.broadcast %25 : f32 to vector<16x131xf32>
    %196 = arith.mulf %191, %195 : vector<16x131xf32>
    %197 = arith.addf %182, %196 : vector<16x131xf32>
    %198 = vector.broadcast %41 : f32 to vector<16x131xf32>
    %199 = arith.mulf %191, %198 : vector<16x131xf32>
    %200 = arith.addf %185, %199 : vector<16x131xf32>
    %201 = vector.broadcast %57 : f32 to vector<16x131xf32>
    %202 = arith.mulf %191, %201 : vector<16x131xf32>
    %203 = arith.addf %188, %202 : vector<16x131xf32>
    %204 = vector.extract_strided_slice %190 {offsets = [0, 1], sizes = [16, 131], strides = [1, 1]} : vector<16x134xf32> to vector<16x131xf32>
    %205 = vector.broadcast %10 : f32 to vector<16x131xf32>
    %206 = arith.mulf %204, %205 : vector<16x131xf32>
    %207 = arith.addf %194, %206 : vector<16x131xf32>
    %208 = vector.broadcast %27 : f32 to vector<16x131xf32>
    %209 = arith.mulf %204, %208 : vector<16x131xf32>
    %210 = arith.addf %197, %209 : vector<16x131xf32>
    %211 = vector.broadcast %43 : f32 to vector<16x131xf32>
    %212 = arith.mulf %204, %211 : vector<16x131xf32>
    %213 = arith.addf %200, %212 : vector<16x131xf32>
    %214 = vector.broadcast %59 : f32 to vector<16x131xf32>
    %215 = arith.mulf %204, %214 : vector<16x131xf32>
    %216 = arith.addf %203, %215 : vector<16x131xf32>
    %217 = vector.extract_strided_slice %190 {offsets = [0, 2], sizes = [16, 131], strides = [1, 1]} : vector<16x134xf32> to vector<16x131xf32>
    %218 = vector.broadcast %12 : f32 to vector<16x131xf32>
    %219 = arith.mulf %217, %218 : vector<16x131xf32>
    %220 = arith.addf %207, %219 : vector<16x131xf32>
    %221 = vector.broadcast %29 : f32 to vector<16x131xf32>
    %222 = arith.mulf %217, %221 : vector<16x131xf32>
    %223 = arith.addf %210, %222 : vector<16x131xf32>
    %224 = vector.broadcast %45 : f32 to vector<16x131xf32>
    %225 = arith.mulf %217, %224 : vector<16x131xf32>
    %226 = arith.addf %213, %225 : vector<16x131xf32>
    %227 = vector.broadcast %61 : f32 to vector<16x131xf32>
    %228 = arith.mulf %217, %227 : vector<16x131xf32>
    %229 = arith.addf %216, %228 : vector<16x131xf32>
    %230 = vector.extract_strided_slice %190 {offsets = [0, 3], sizes = [16, 131], strides = [1, 1]} : vector<16x134xf32> to vector<16x131xf32>
    %231 = vector.broadcast %14 : f32 to vector<16x131xf32>
    %232 = arith.mulf %230, %231 : vector<16x131xf32>
    %233 = arith.addf %220, %232 : vector<16x131xf32>
    %234 = vector.broadcast %31 : f32 to vector<16x131xf32>
    %235 = arith.mulf %230, %234 : vector<16x131xf32>
    %236 = arith.addf %223, %235 : vector<16x131xf32>
    %237 = vector.broadcast %47 : f32 to vector<16x131xf32>
    %238 = arith.mulf %230, %237 : vector<16x131xf32>
    %239 = arith.addf %226, %238 : vector<16x131xf32>
    %240 = vector.broadcast %63 : f32 to vector<16x131xf32>
    %241 = arith.mulf %230, %240 : vector<16x131xf32>
    %242 = arith.addf %229, %241 : vector<16x131xf32>
    %c3_130 = arith.constant 3 : index
    %c0_131 = arith.constant 0 : index
    %c0_132 = arith.constant 0 : index
    %243 = vector.load %arg1[%c3_130, %c0_131, %c0_132] : memref<4x16x134xf32, #tpu.memory_space<vmem>>, vector<1x16x134xf32>
    %244 = vector.shape_cast %243 : vector<1x16x134xf32> to vector<16x134xf32>
    %245 = vector.extract_strided_slice %244 {offsets = [0, 0], sizes = [16, 131], strides = [1, 1]} : vector<16x134xf32> to vector<16x131xf32>
    %246 = vector.broadcast %9 : f32 to vector<16x131xf32>
    %247 = arith.mulf %245, %246 : vector<16x131xf32>
    %248 = arith.addf %233, %247 : vector<16x131xf32>
    %249 = vector.broadcast %26 : f32 to vector<16x131xf32>
    %250 = arith.mulf %245, %249 : vector<16x131xf32>
    %251 = arith.addf %236, %250 : vector<16x131xf32>
    %252 = vector.broadcast %42 : f32 to vector<16x131xf32>
    %253 = arith.mulf %245, %252 : vector<16x131xf32>
    %254 = arith.addf %239, %253 : vector<16x131xf32>
    %255 = vector.broadcast %58 : f32 to vector<16x131xf32>
    %256 = arith.mulf %245, %255 : vector<16x131xf32>
    %257 = arith.addf %242, %256 : vector<16x131xf32>
    %258 = vector.extract_strided_slice %244 {offsets = [0, 1], sizes = [16, 131], strides = [1, 1]} : vector<16x134xf32> to vector<16x131xf32>
    %259 = vector.broadcast %11 : f32 to vector<16x131xf32>
    %260 = arith.mulf %258, %259 : vector<16x131xf32>
    %261 = arith.addf %248, %260 : vector<16x131xf32>
    %262 = vector.broadcast %28 : f32 to vector<16x131xf32>
    %263 = arith.mulf %258, %262 : vector<16x131xf32>
    %264 = arith.addf %251, %263 : vector<16x131xf32>
    %265 = vector.broadcast %44 : f32 to vector<16x131xf32>
    %266 = arith.mulf %258, %265 : vector<16x131xf32>
    %267 = arith.addf %254, %266 : vector<16x131xf32>
    %268 = vector.broadcast %60 : f32 to vector<16x131xf32>
    %269 = arith.mulf %258, %268 : vector<16x131xf32>
    %270 = arith.addf %257, %269 : vector<16x131xf32>
    %271 = vector.extract_strided_slice %244 {offsets = [0, 2], sizes = [16, 131], strides = [1, 1]} : vector<16x134xf32> to vector<16x131xf32>
    %272 = vector.broadcast %13 : f32 to vector<16x131xf32>
    %273 = arith.mulf %271, %272 : vector<16x131xf32>
    %274 = arith.addf %261, %273 : vector<16x131xf32>
    %275 = vector.broadcast %30 : f32 to vector<16x131xf32>
    %276 = arith.mulf %271, %275 : vector<16x131xf32>
    %277 = arith.addf %264, %276 : vector<16x131xf32>
    %278 = vector.broadcast %46 : f32 to vector<16x131xf32>
    %279 = arith.mulf %271, %278 : vector<16x131xf32>
    %280 = arith.addf %267, %279 : vector<16x131xf32>
    %281 = vector.broadcast %62 : f32 to vector<16x131xf32>
    %282 = arith.mulf %271, %281 : vector<16x131xf32>
    %283 = arith.addf %270, %282 : vector<16x131xf32>
    %284 = vector.extract_strided_slice %244 {offsets = [0, 3], sizes = [16, 131], strides = [1, 1]} : vector<16x134xf32> to vector<16x131xf32>
    %285 = vector.broadcast %15 : f32 to vector<16x131xf32>
    %286 = arith.mulf %284, %285 : vector<16x131xf32>
    %287 = arith.addf %274, %286 : vector<16x131xf32>
    %288 = vector.broadcast %32 : f32 to vector<16x131xf32>
    %289 = arith.mulf %284, %288 : vector<16x131xf32>
    %290 = arith.addf %277, %289 : vector<16x131xf32>
    %291 = vector.broadcast %48 : f32 to vector<16x131xf32>
    %292 = arith.mulf %284, %291 : vector<16x131xf32>
    %293 = arith.addf %280, %292 : vector<16x131xf32>
    %294 = vector.broadcast %64 : f32 to vector<16x131xf32>
    %295 = arith.mulf %284, %294 : vector<16x131xf32>
    %296 = arith.addf %283, %295 : vector<16x131xf32>
    %297 = math.absf %287 : vector<16x131xf32>
    %cst_133 = arith.constant dense<0.000000e+00> : vector<16x8xf32>
    %298 = tpu.matmul %297, %68, %cst_133 {dimension_numbers = #tpu.dot_dimension_numbers<[1], [0], [0], [1], [0, 0, 1, 1], [], []>} : vector<16x131xf32>, vector<131x8xf32>, vector<16x8xf32> -> vector<16x8xf32>
    %299 = tpu.transpose %298, [1, 0] : vector<16x8xf32> -> vector<8x16xf32>
    %c0_134 = arith.constant 0 : index
    %c0_135 = arith.constant 0 : index
    %300 = vector.load %arg7[%c0_134, %c0_135] : memref<8x16xf32, #tpu.memory_space<vmem>>, vector<8x16xf32>
    tpu.vector_store %arg7[%c0_134, %c0_135], %299 {strides = array<i32>} : memref<8x16xf32, #tpu.memory_space<vmem>>, vector<8x16xf32>,
    %c0_136 = arith.constant 0 : index
    %c0_137 = arith.constant 0 : index
    %c0_138 = arith.constant 0 : index
    %301 = vector.load %arg8[%c0_136, %c0_137, %c0_138] : memref<3x16x131xf32, #tpu.memory_space<vmem>>, vector<1x16x131xf32>
    %302 = vector.shape_cast %301 : vector<1x16x131xf32> to vector<16x131xf32>
    %303 = vector.shape_cast %290 : vector<16x131xf32> to vector<1x16x131xf32>
    tpu.vector_store %arg8[%c0_136, %c0_137, %c0_138], %303 {strides = array<i32>} : memref<3x16x131xf32, #tpu.memory_space<vmem>>, vector<1x16x131xf32>,
    %c1_139 = arith.constant 1 : index
    %c0_140 = arith.constant 0 : index
    %c0_141 = arith.constant 0 : index
    %304 = vector.load %arg8[%c1_139, %c0_140, %c0_141] : memref<3x16x131xf32, #tpu.memory_space<vmem>>, vector<1x16x131xf32>
    %305 = vector.shape_cast %304 : vector<1x16x131xf32> to vector<16x131xf32>
    %306 = vector.shape_cast %293 : vector<16x131xf32> to vector<1x16x131xf32>
    tpu.vector_store %arg8[%c1_139, %c0_140, %c0_141], %306 {strides = array<i32>} : memref<3x16x131xf32, #tpu.memory_space<vmem>>, vector<1x16x131xf32>,
    %c2_142 = arith.constant 2 : index
    %c0_143 = arith.constant 0 : index
    %c0_144 = arith.constant 0 : index
    %307 = vector.load %arg8[%c2_142, %c0_143, %c0_144] : memref<3x16x131xf32, #tpu.memory_space<vmem>>, vector<1x16x131xf32>
    %308 = vector.shape_cast %307 : vector<1x16x131xf32> to vector<16x131xf32>
    %309 = vector.shape_cast %296 : vector<16x131xf32> to vector<1x16x131xf32>
    tpu.vector_store %arg8[%c2_142, %c0_143, %c0_144], %309 {strides = array<i32>} : memref<3x16x131xf32, #tpu.memory_space<vmem>>, vector<1x16x131xf32>,
    return
  }
  func.func @transform_0(%arg0: i32) -> (i32, i32, i32) {
    %c0_i32 = arith.constant 0 : i32
    %c0_i32_0 = arith.constant 0 : i32
    %c0_i32_1 = arith.constant 0 : i32
    return %c0_i32, %arg0, %c0_i32_0 : i32, i32, i32
  }
  func.func @transform_1(%arg0: i32) -> (i32, i32) {
    %c0_i32 = arith.constant 0 : i32
    %c0_i32_0 = arith.constant 0 : i32
    %c0_i32_1 = arith.constant 0 : i32
    return %c0_i32, %c0_i32_0 : i32, i32
  }
  func.func @transform_2(%arg0: i32) -> i32 {
    %c0_i32 = arith.constant 0 : i32
    %c0_i32_0 = arith.constant 0 : i32
    return %c0_i32 : i32
  }
  func.func @transform_3(%arg0: i32) -> (i32, i32) {
    %c0_i32 = arith.constant 0 : i32
    %c0_i32_0 = arith.constant 0 : i32
    %c0_i32_1 = arith.constant 0 : i32
    return %c0_i32, %c0_i32_0 : i32, i32
  }
  func.func @transform_4(%arg0: i32) -> (i32, i32) {
    %c0_i32 = arith.constant 0 : i32
    %c0_i32_0 = arith.constant 0 : i32
    %c0_i32_1 = arith.constant 0 : i32
    return %c0_i32, %c0_i32_0 : i32, i32
  }
  func.func @transform_5(%arg0: i32) -> i32 {
    %c0_i32 = arith.constant 0 : i32
    %c0_i32_0 = arith.constant 0 : i32
    return %c0_i32 : i32
  }
  func.func @transform_6(%arg0: i32) -> (i32, i32) {
    %c0_i32 = arith.constant 0 : i32
    %c0_i32_0 = arith.constant 0 : i32
    return %c0_i32, %arg0 : i32, i32
  }
  func.func @transform_7(%arg0: i32) -> (i32, i32, i32) {
    %c0_i32 = arith.constant 0 : i32
    %c0_i32_0 = arith.constant 0 : i32
    %c0_i32_1 = arith.constant 0 : i32
    return %c0_i32, %arg0, %c0_i32_0 : i32, i32, i32
  }
}

</mosaic_0001>

<llo_original>
// kernel: wavelet_convolution_forward.1
$region0: #{wavelet_convolution_forward.1}
  #allocation0 [shape = 'u32[]', space=smem, size = 0x4, offset = 0x4, fixed_abs, tag = 'smem constant byte address 0x4 - core index']
  #allocation1 [shape = 'u32[144,128]{1,0:T(1,128)}', space=vmem, size = 0x12000, scoped, tag = 'internal scratch']
  #allocation2 [shape = 'f32[1]{0:T(128)S(6)}', space=smem, size = 0x200, scoped, tag = 'scoped memory for wavelet_convolution_forward.1']
  %s0 = inlined_call_operand.vmem [shape: f32[4,16,134], index: 0, kind: input, shape index: {}]
  %s1 = inlined_call_operand.vmem [shape: f32[2,8], index: 1, kind: input, shape index: {}]
  %s2 = inlined_call_operand.<no memory space> [shape: f32[1], index: 2, kind: input, shape index: {}]
  %s3 = inlined_call_operand.vmem [shape: f32[131,8], index: 3, kind: input, shape index: {}]
  %s4 = inlined_call_operand.vmem [shape: f32[3,16], index: 4, kind: input, shape index: {}]
  %s5 = inlined_call_operand.vmem [shape: f32[3], index: 5, kind: input, shape index: {}]
  %s6 = inlined_call_operand.hbm [shape: f32[8,16], index: 6, kind: output, shape index: {0}]
  %s7 = inlined_call_operand.hbm [shape: f32[3,16,131], index: 7, kind: output, shape index: {1}]
  %8 = xla_tuple %s6, %s7
  %s9 = sld [smem:[#allocation0]]
  $region54: #{wavelet_convolution_forward.1} parent=0
    _
  %s11 = ssub.s32 1, %s9
  %s12 = scalar_select 0, %s11, %s9
  %13 = sst [smem:[#allocation2]] %s2
  $region1: #{wavelet_convolution_forward.1} parent=0
    #allocation3 [shape = 'u8[1024]{0}', space=smem, size = 0x400, scoped, tag = 'input window, operand 1, single buffered']
    #allocation4 [shape = 's32[1]{0}', space=sflag, size = 0x4, scoped, tag = 'scoped memory for wavelet_convolution_forward.1']
    #allocation5 [shape = 's32[1]{0}', space=sflag, size = 0x4, scoped, tag = 'scoped memory for wavelet_convolution_forward.1']
    #allocation6 [shape = 'u8[2048]{0}', space=smem, size = 0x800, scoped, tag = 'input window, operand 4, single buffered']
    #allocation7 [shape = 's32[1]{0}', space=sflag, size = 0x4, scoped, tag = 'scoped memory for wavelet_convolution_forward.1']
    #allocation8 [shape = 'u8[512]{0}', space=smem, size = 0x200, scoped, tag = 'input window, operand 5, single buffered']
    #allocation9 [shape = 'u8[4096]{0}', space=vmem, size = 0x1000, scoped, tag = 'output window, operand 0, single buffered']
    #allocation10 [shape = 'u8[49152]{0}', space=vmem, size = 0xc000, scoped, tag = 'output window, operand 1, single buffered']
    #allocation11 [shape = 's32[1]{0}', space=sflag, size = 0x4, scoped, tag = 'scoped memory for wavelet_convolution_forward.1']
    %14 = vsyncpa [#allocation5], 0
    %15 = vsyncpa [#allocation7], 0
    %16 = vsyncpa [#allocation4], 0
    %17 = vsyncpa [#allocation11], 0
    // Predicated region
    $region2: #{wavelet_convolution_forward.1} parent=1 // pred_check
      _
    $region3: #{wavelet_convolution_forward.1} parent=1 // pred_check_branch
      %19 = sbr.rel (0) target = $region5
    $region4: #{wavelet_convolution_forward.1} parent=1 // pred_region
      _
    $region5: #{wavelet_convolution_forward.1} parent=1 // pred_fallthru
      _
    // Predicated region
    $region6: #{wavelet_convolution_forward.1} parent=1 // pred_check
      _
    $region7: #{wavelet_convolution_forward.1} parent=1 // pred_check_branch
      %21 = sbr.rel (0) target = $region9
    $region8: #{wavelet_convolution_forward.1} parent=1 // pred_region
      %s23 = ssub.s32 32, 32
      %24 = vsyncadd [#allocation5], %s23
      %s26 = sshll.u32 %s1, 4
      %s27 = int_to_ptr.vmem [resolvable:$true] %s26
      %29 = dma.vmem_to_smem %s27, 32, [#allocation3], [#allocation5]
    $region9: #{wavelet_convolution_forward.1} parent=1 // pred_fallthru
      _
    // Predicated region
    $region10: #{wavelet_convolution_forward.1} parent=1 // pred_check
      _
    $region11: #{wavelet_convolution_forward.1} parent=1 // pred_check_branch
      %31 = sbr.rel (0) target = $region13
    $region12: #{wavelet_convolution_forward.1} parent=1 // pred_region
      _
    $region13: #{wavelet_convolution_forward.1} parent=1 // pred_fallthru
      _
    // Predicated region
    $region14: #{wavelet_convolution_forward.1} parent=1 // pred_check
      _
    $region15: #{wavelet_convolution_forward.1} parent=1 // pred_check_branch
      %33 = sbr.rel (0) target = $region17
    $region16: #{wavelet_convolution_forward.1} parent=1 // pred_region
      _
    $region17: #{wavelet_convolution_forward.1} parent=1 // pred_fallthru
      _
    // Predicated region
    $region18: #{wavelet_convolution_forward.1} parent=1 // pred_check
      _
    $region19: #{wavelet_convolution_forward.1} parent=1 // pred_check_branch
      %35 = sbr.rel (0) target = $region21
    $region20: #{wavelet_convolution_forward.1} parent=1 // pred_region
      %s37 = ssub.s32 64, 64
      %38 = vsyncadd [#allocation7], %s37
      %s40 = sshll.u32 %s4, 4
      %s41 = int_to_ptr.vmem [resolvable:$true] %s40
      %43 = dma.vmem_to_smem %s41, 64, [#allocation6], [#allocation7]
    $region21: #{wavelet_convolution_forward.1} parent=1 // pred_fallthru
      _
    // Predicated region
    $region22: #{wavelet_convolution_forward.1} parent=1 // pred_check
      _
    $region23: #{wavelet_convolution_forward.1} parent=1 // pred_check_branch
      %45 = sbr.rel (0) target = $region25
    $region24: #{wavelet_convolution_forward.1} parent=1 // pred_region
      %s47 = ssub.s32 16, 16
      %48 = vsyncadd [#allocation7], %s47
      %s50 = sshll.u32 %s5, 4
      %s51 = int_to_ptr.vmem [resolvable:$true] %s50
      %53 = dma.vmem_to_smem %s51, 16, [#allocation8], [#allocation7]
    $region25: #{wavelet_convolution_forward.1} parent=1 // pred_fallthru
      _
    // Predicated region
    $region26: #{wavelet_convolution_forward.1} parent=1 // pred_check
      _
    $region27: #{wavelet_convolution_forward.1} parent=1 // pred_check_branch
      %55 = sbr.rel (0) target = $region29
    $region28: #{wavelet_convolution_forward.1} parent=1 // pred_region
      %56 = dma.done [#allocation5], 32
    $region29: #{wavelet_convolution_forward.1} parent=1 // pred_fallthru
      _
    // Predicated region
    $region30: #{wavelet_convolution_forward.1} parent=1 // pred_check
      _
    $region31: #{wavelet_convolution_forward.1} parent=1 // pred_check_branch
      %58 = sbr.rel (0) target = $region33
    $region32: #{wavelet_convolution_forward.1} parent=1 // pred_region
      %59 = dma.done [#allocation7], 64
    $region33: #{wavelet_convolution_forward.1} parent=1 // pred_fallthru
      _
    // Predicated region
    $region34: #{wavelet_convolution_forward.1} parent=1 // pred_check
      _
    $region35: #{wavelet_convolution_forward.1} parent=1 // pred_check_branch
      %61 = sbr.rel (0) target = $region37
    $region36: #{wavelet_convolution_forward.1} parent=1 // pred_region
      %62 = dma.done [#allocation7], 16
    $region37: #{wavelet_convolution_forward.1} parent=1 // pred_fallthru
      _
    %63 = sfence
    %s64 = sld [smem:[#allocation3]]
    %s65 = sld [smem:[#allocation3 + $0x1]]
    %s66 = sld [smem:[#allocation3 + $0x2]]
    %s67 = sld [smem:[#allocation3 + $0x3]]
    %s68 = sld [smem:[#allocation3 + $0x4]]
    %s69 = sld [smem:[#allocation3 + $0x5]]
    %s70 = sld [smem:[#allocation3 + $0x6]]
    %s71 = sld [smem:[#allocation3 + $0x7]]
    %s72 = sld [smem:[#allocation3 + $0x80]]
    %s73 = sld [smem:[#allocation3 + $0x81]]
    %s74 = sld [smem:[#allocation3 + $0x82]]
    %s75 = sld [smem:[#allocation3 + $0x83]]
    %s76 = sld [smem:[#allocation3 + $0x84]]
    %s77 = sld [smem:[#allocation3 + $0x85]]
    %s78 = sld [smem:[#allocation3 + $0x86]]
    %s79 = sld [smem:[#allocation3 + $0x87]]
    %s80 = sld [smem:[#allocation2]]
    %s81 = sld [smem:[#allocation6]]
    %s82 = sld [smem:[#allocation6 + $0x1]]
    %s83 = sld [smem:[#allocation6 + $0x2]]
    %s84 = sld [smem:[#allocation6 + $0x3]]
    %s85 = sld [smem:[#allocation6 + $0x4]]
    %s86 = sld [smem:[#allocation6 + $0x5]]
    %s87 = sld [smem:[#allocation6 + $0x6]]
    %s88 = sld [smem:[#allocation6 + $0x7]]
    %s89 = sld [smem:[#allocation6 + $0x8]]
    %s90 = sld [smem:[#allocation6 + $0x9]]
    %s91 = sld [smem:[#allocation6 + $0xa]]
    %s92 = sld [smem:[#allocation6 + $0xb]]
    %s93 = sld [smem:[#allocation6 + $0xc]]
    %s94 = sld [smem:[#allocation6 + $0xd]]
    %s95 = sld [smem:[#allocation6 + $0xe]]
    %s96 = sld [smem:[#allocation6 + $0xf]]
    %s97 = sld [smem:[#allocation6 + $0x80]]
    %s98 = sld [smem:[#allocation6 + $0x81]]
    %s99 = sld [smem:[#allocation6 + $0x82]]
    %s100 = sld [smem:[#allocation6 + $0x83]]
    %s101 = sld [smem:[#allocation6 + $0x84]]
    %s102 = sld [smem:[#allocation6 + $0x85]]
    %s103 = sld [smem:[#allocation6 + $0x86]]
    %s104 = sld [smem:[#allocation6 + $0x87]]
    %s105 = sld [smem:[#allocation6 + $0x88]]
    %s106 = sld [smem:[#allocation6 + $0x89]]
    %s107 = sld [smem:[#allocation6 + $0x8a]]
    %s108 = sld [smem:[#allocation6 + $0x8b]]
    %s109 = sld [smem:[#allocation6 + $0x8c]]
    %s110 = sld [smem:[#allocation6 + $0x8d]]
    %s111 = sld [smem:[#allocation6 + $0x8e]]
    %s112 = sld [smem:[#allocation6 + $0x8f]]
    %s113 = sld [smem:[#allocation6 + $0x100]]
    %s114 = sld [smem:[#allocation6 + $0x101]]
    %s115 = sld [smem:[#allocation6 + $0x102]]
    %s116 = sld [smem:[#allocation6 + $0x103]]
    %s117 = sld [smem:[#allocation6 + $0x104]]
    %s118 = sld [smem:[#allocation6 + $0x105]]
    %s119 = sld [smem:[#allocation6 + $0x106]]
    %s120 = sld [smem:[#allocation6 + $0x107]]
    %s121 = sld [smem:[#allocation6 + $0x108]]
    %s122 = sld [smem:[#allocation6 + $0x109]]
    %s123 = sld [smem:[#allocation6 + $0x10a]]
    %s124 = sld [smem:[#allocation6 + $0x10b]]
    %s125 = sld [smem:[#allocation6 + $0x10c]]
    %s126 = sld [smem:[#allocation6 + $0x10d]]
    %s127 = sld [smem:[#allocation6 + $0x10e]]
    %s128 = sld [smem:[#allocation6 + $0x10f]]
    %s129 = sld [smem:[#allocation8]]
    %s130 = sld [smem:[#allocation8 + $0x1]]
    %s131 = sld [smem:[#allocation8 + $0x2]]
    %v132 = vld [vmem:[%s3] sm:$0xff]
    %v133 = vld [vmem:[%s3 + $0x8] sm:$0xff]
    %v134 = vld [vmem:[%s3 + $0x10] sm:$0xff]
    %v135 = vld [vmem:[%s3 + $0x18] sm:$0xff]
    %v136 = vld [vmem:[%s3 + $0x20] sm:$0xff]
    %v137 = vld [vmem:[%s3 + $0x28] sm:$0xff]
    %v138 = vld [vmem:[%s3 + $0x30] sm:$0xff]
    %v139 = vld [vmem:[%s3 + $0x38] sm:$0xff]
    %v140 = vld [vmem:[%s3 + $0x40] sm:$0xff]
    %v141 = vld [vmem:[%s3 + $0x48] sm:$0xff]
    %v142 = vld [vmem:[%s3 + $0x50] sm:$0xff]
    %v143 = vld [vmem:[%s3 + $0x58] sm:$0xff]
    %v144 = vld [vmem:[%s3 + $0x60] sm:$0xff]
    %v145 = vld [vmem:[%s3 + $0x68] sm:$0xff]
    %v146 = vld [vmem:[%s3 + $0x70] sm:$0xff]
    %v147 = vld [vmem:[%s3 + $0x78] sm:$0xff]
    %v148 = vld [vmem:[%s3 + $0x80] sm:$0x7]
    %v149 = vstv %s80
    %v150 = vadd.f32 %v149, 0.0
    %v151 = vstv %s129
    %v152 = vadd.f32 %v151, 0.0
    %v153 = vstv %s130
    %v154 = vadd.f32 %v153, 0.0
    %v155 = vstv %s131
    %v156 = vadd.f32 %v155, 0.0
    %v157 = vld [vmem:[%s0] sm:$0xff]
    %v158 = vld [vmem:[%s0 + $0x8] sm:$0xff]
    %v159 = vld [vmem:[%s0 + $0x10] sm:$0xff]
    %v160 = vld [vmem:[%s0 + $0x18] sm:$0xff]
    %v161 = vstv %s64
    %v162 = vmul.f32 %v157, %v161
    %v163 = vmul.f32 %v158, %v161
    %v164 = vmul.f32 %v159, %v161
    %v165 = vmul.f32 %v160, %v161
    %v166 = vadd.f32 %v150, %v162
    %v167 = vadd.f32 %v150, %v163
    %v168 = vadd.f32 %v150, %v164
    %v169 = vadd.f32 %v150, %v165
    %v170 = vstv %s81
    %v171 = vmul.f32 %v157, %v170
    %v172 = vmul.f32 %v158, %v170
    %v173 = vmul.f32 %v159, %v170
    %v174 = vmul.f32 %v160, %v170
    %v175 = vadd.f32 %v152, %v171
    %v176 = vadd.f32 %v152, %v172
    %v177 = vadd.f32 %v152, %v173
    %v178 = vadd.f32 %v152, %v174
    %v179 = vstv %s97
    %v180 = vmul.f32 %v157, %v179
    %v181 = vmul.f32 %v158, %v179
    %v182 = vmul.f32 %v159, %v179
    %v183 = vmul.f32 %v160, %v179
    %v184 = vadd.f32 %v154, %v180
    %v185 = vadd.f32 %v154, %v181
    %v186 = vadd.f32 %v154, %v182
    %v187 = vadd.f32 %v154, %v183
    %v188 = vstv %s113
    %v189 = vmul.f32 %v157, %v188
    %v190 = vmul.f32 %v158, %v188
    %v191 = vmul.f32 %v159, %v188
    %v192 = vmul.f32 %v160, %v188
    %v193 = vadd.f32 %v156, %v189
    %v194 = vadd.f32 %v156, %v190
    %v195 = vadd.f32 %v156, %v191
    %v196 = vadd.f32 %v156, %v192
    %v197 = vstv %s66
    %v198 = vmul.f32 %v157, %v197
    %v199 = vmul.f32 %v158, %v197
    %v200 = vmul.f32 %v159, %v197
    %v201 = vmul.f32 %v160, %v197
    %206 = vrot.lane.b32.xlu0 %v198, 127
    %v207 = vpop.permute.xlu0 %206
    %208 = vrot.lane.b32.xlu0 %v199, 127
    %v209 = vpop.permute.xlu0 %208
    %210 = vrot.lane.b32.xlu0 %v200, 127
    %v211 = vpop.permute.xlu0 %210
    %212 = vrot.lane.b32.xlu0 %v201, 127
    %v213 = vpop.permute.xlu0 %212
    %vm214 = vcmask 1039360
    %v215 = vsel %vm214, %v207, %v209
    %v216 = vsel %vm214, %v211, %v213
    %v221 = vadd.f32 %v166, %v215
    %v222 = vadd.f32 %v167, %v209
    %v223 = vadd.f32 %v168, %v216
    %v224 = vadd.f32 %v169, %v213
    %v225 = vstv %s83
    %v226 = vmul.f32 %v157, %v225
    %v227 = vmul.f32 %v158, %v225
    %v228 = vmul.f32 %v159, %v225
    %v229 = vmul.f32 %v160, %v225
    %234 = vrot.lane.b32.xlu0 %v226, 127
    %v235 = vpop.permute.xlu0 %234
    %236 = vrot.lane.b32.xlu0 %v227, 127
    %v237 = vpop.permute.xlu0 %236
    %238 = vrot.lane.b32.xlu0 %v228, 127
    %v239 = vpop.permute.xlu0 %238
    %240 = vrot.lane.b32.xlu0 %v229, 127
    %v241 = vpop.permute.xlu0 %240
    %v242 = vsel %vm214, %v235, %v237
    %v243 = vsel %vm214, %v239, %v241
    %v248 = vadd.f32 %v175, %v242
    %v249 = vadd.f32 %v176, %v237
    %v250 = vadd.f32 %v177, %v243
    %v251 = vadd.f32 %v178, %v241
    %v252 = vstv %s99
    %v253 = vmul.f32 %v157, %v252
    %v254 = vmul.f32 %v158, %v252
    %v255 = vmul.f32 %v159, %v252
    %v256 = vmul.f32 %v160, %v252
    %261 = vrot.lane.b32.xlu0 %v253, 127
    %v262 = vpop.permute.xlu0 %261
    %263 = vrot.lane.b32.xlu0 %v254, 127
    %v264 = vpop.permute.xlu0 %263
    %265 = vrot.lane.b32.xlu0 %v255, 127
    %v266 = vpop.permute.xlu0 %265
    %267 = vrot.lane.b32.xlu0 %v256, 127
    %v268 = vpop.permute.xlu0 %267
    %v269 = vsel %vm214, %v262, %v264
    %v270 = vsel %vm214, %v266, %v268
    %v275 = vadd.f32 %v184, %v269
    %v276 = vadd.f32 %v185, %v264
    %v277 = vadd.f32 %v186, %v270
    %v278 = vadd.f32 %v187, %v268
    %v279 = vstv %s115
    %v280 = vmul.f32 %v157, %v279
    %v281 = vmul.f32 %v158, %v279
    %v282 = vmul.f32 %v159, %v279
    %v283 = vmul.f32 %v160, %v279
    %288 = vrot.lane.b32.xlu0 %v280, 127
    %v289 = vpop.permute.xlu0 %288
    %290 = vrot.lane.b32.xlu0 %v281, 127
    %v291 = vpop.permute.xlu0 %290
    %292 = vrot.lane.b32.xlu0 %v282, 127
    %v293 = vpop.permute.xlu0 %292
    %294 = vrot.lane.b32.xlu0 %v283, 127
    %v295 = vpop.permute.xlu0 %294
    %v296 = vsel %vm214, %v289, %v291
    %v297 = vsel %vm214, %v293, %v295
    %v302 = vadd.f32 %v193, %v296
    %v303 = vadd.f32 %v194, %v291
    %v304 = vadd.f32 %v195, %v297
    %v305 = vadd.f32 %v196, %v295
    %v306 = vstv %s68
    %v307 = vmul.f32 %v157, %v306
    %v308 = vmul.f32 %v158, %v306
    %v309 = vmul.f32 %v159, %v306
    %v310 = vmul.f32 %v160, %v306
    %315 = vrot.lane.b32.xlu0 %v307, 126
    %v316 = vpop.permute.xlu0 %315
    %317 = vrot.lane.b32.xlu0 %v308, 126
    %v318 = vpop.permute.xlu0 %317
    %319 = vrot.lane.b32.xlu0 %v309, 126
    %v320 = vpop.permute.xlu0 %319
    %321 = vrot.lane.b32.xlu0 %v310, 126
    %v322 = vpop.permute.xlu0 %321
    %vm323 = vcmask 1031168
    %v324 = vsel %vm323, %v316, %v318
    %v325 = vsel %vm323, %v320, %v322
    %v330 = vadd.f32 %v221, %v324
    %v331 = vadd.f32 %v222, %v318
    %v332 = vadd.f32 %v223, %v325
    %v333 = vadd.f32 %v224, %v322
    %v334 = vstv %s85
    %v335 = vmul.f32 %v157, %v334
    %v336 = vmul.f32 %v158, %v334
    %v337 = vmul.f32 %v159, %v334
    %v338 = vmul.f32 %v160, %v334
    %343 = vrot.lane.b32.xlu0 %v335, 126
    %v344 = vpop.permute.xlu0 %343
    %345 = vrot.lane.b32.xlu0 %v336, 126
    %v346 = vpop.permute.xlu0 %345
    %347 = vrot.lane.b32.xlu0 %v337, 126
    %v348 = vpop.permute.xlu0 %347
    %349 = vrot.lane.b32.xlu0 %v338, 126
    %v350 = vpop.permute.xlu0 %349
    %v351 = vsel %vm323, %v344, %v346
    %v352 = vsel %vm323, %v348, %v350
    %v357 = vadd.f32 %v248, %v351
    %v358 = vadd.f32 %v249, %v346
    %v359 = vadd.f32 %v250, %v352
    %v360 = vadd.f32 %v251, %v350
    %v361 = vstv %s101
    %v362 = vmul.f32 %v157, %v361
    %v363 = vmul.f32 %v158, %v361
    %v364 = vmul.f32 %v159, %v361
    %v365 = vmul.f32 %v160, %v361
    %370 = vrot.lane.b32.xlu0 %v362, 126
    %v371 = vpop.permute.xlu0 %370
    %372 = vrot.lane.b32.xlu0 %v363, 126
    %v373 = vpop.permute.xlu0 %372
    %374 = vrot.lane.b32.xlu0 %v364, 126
    %v375 = vpop.permute.xlu0 %374
    %376 = vrot.lane.b32.xlu0 %v365, 126
    %v377 = vpop.permute.xlu0 %376
    %v378 = vsel %vm323, %v371, %v373
    %v379 = vsel %vm323, %v375, %v377
    %v384 = vadd.f32 %v275, %v378
    %v385 = vadd.f32 %v276, %v373
    %v386 = vadd.f32 %v277, %v379
    %v387 = vadd.f32 %v278, %v377
    %v388 = vstv %s117
    %v389 = vmul.f32 %v157, %v388
    %v390 = vmul.f32 %v158, %v388
    %v391 = vmul.f32 %v159, %v388
    %v392 = vmul.f32 %v160, %v388
    %397 = vrot.lane.b32.xlu0 %v389, 126
    %v398 = vpop.permute.xlu0 %397
    %399 = vrot.lane.b32.xlu0 %v390, 126
    %v400 = vpop.permute.xlu0 %399
    %401 = vrot.lane.b32.xlu0 %v391, 126
    %v402 = vpop.permute.xlu0 %401
    %403 = vrot.lane.b32.xlu0 %v392, 126
    %v404 = vpop.permute.xlu0 %403
    %v405 = vsel %vm323, %v398, %v400
    %v406 = vsel %vm323, %v402, %v404
    %v411 = vadd.f32 %v302, %v405
    %v412 = vadd.f32 %v303, %v400
    %v413 = vadd.f32 %v304, %v406
    %v414 = vadd.f32 %v305, %v404
    %v415 = vstv %s70
    %v416 = vmul.f32 %v157, %v415
    %v417 = vmul.f32 %v158, %v415
    %v418 = vmul.f32 %v159, %v415
    %v419 = vmul.f32 %v160, %v415
    %424 = vrot.lane.b32.xlu0 %v416, 125
    %v425 = vpop.permute.xlu0 %424
    %426 = vrot.lane.b32.xlu0 %v417, 125
    %v427 = vpop.permute.xlu0 %426
    %428 = vrot.lane.b32.xlu0 %v418, 125
    %v429 = vpop.permute.xlu0 %428
    %430 = vrot.lane.b32.xlu0 %v419, 125
    %v431 = vpop.permute.xlu0 %430
    %vm432 = vcmask 1022976
    %v433 = vsel %vm432, %v425, %v427
    %v434 = vsel %vm432, %v429, %v431
    %v439 = vadd.f32 %v330, %v433
    %v440 = vadd.f32 %v331, %v427
    %v441 = vadd.f32 %v332, %v434
    %v442 = vadd.f32 %v333, %v431
    %v443 = vstv %s87
    %v444 = vmul.f32 %v157, %v443
    %v445 = vmul.f32 %v158, %v443
    %v446 = vmul.f32 %v159, %v443
    %v447 = vmul.f32 %v160, %v443
    %452 = vrot.lane.b32.xlu0 %v444, 125
    %v453 = vpop.permute.xlu0 %452
    %454 = vrot.lane.b32.xlu0 %v445, 125
    %v455 = vpop.permute.xlu0 %454
    %456 = vrot.lane.b32.xlu0 %v446, 125
    %v457 = vpop.permute.xlu0 %456
    %458 = vrot.lane.b32.xlu0 %v447, 125
    %v459 = vpop.permute.xlu0 %458
    %v460 = vsel %vm432, %v453, %v455
    %v461 = vsel %vm432, %v457, %v459
    %v466 = vadd.f32 %v357, %v460
    %v467 = vadd.f32 %v358, %v455
    %v468 = vadd.f32 %v359, %v461
    %v469 = vadd.f32 %v360, %v459
    %v470 = vstv %s103
    %v471 = vmul.f32 %v157, %v470
    %v472 = vmul.f32 %v158, %v470
    %v473 = vmul.f32 %v159, %v470
    %v474 = vmul.f32 %v160, %v470
    %479 = vrot.lane.b32.xlu0 %v471, 125
    %v480 = vpop.permute.xlu0 %479
    %481 = vrot.lane.b32.xlu0 %v472, 125
    %v482 = vpop.permute.xlu0 %481
    %483 = vrot.lane.b32.xlu0 %v473, 125
    %v484 = vpop.permute.xlu0 %483
    %485 = vrot.lane.b32.xlu0 %v474, 125
    %v486 = vpop.permute.xlu0 %485
    %v487 = vsel %vm432, %v480, %v482
    %v488 = vsel %vm432, %v484, %v486
    %v493 = vadd.f32 %v384, %v487
    %v494 = vadd.f32 %v385, %v482
    %v495 = vadd.f32 %v386, %v488
    %v496 = vadd.f32 %v387, %v486
    %v497 = vstv %s119
    %v498 = vmul.f32 %v157, %v497
    %v499 = vmul.f32 %v158, %v497
    %v500 = vmul.f32 %v159, %v497
    %v501 = vmul.f32 %v160, %v497
    %506 = vrot.lane.b32.xlu0 %v498, 125
    %v507 = vpop.permute.xlu0 %506
    %508 = vrot.lane.b32.xlu0 %v499, 125
    %v509 = vpop.permute.xlu0 %508
    %510 = vrot.lane.b32.xlu0 %v500, 125
    %v511 = vpop.permute.xlu0 %510
    %512 = vrot.lane.b32.xlu0 %v501, 125
    %v513 = vpop.permute.xlu0 %512
    %v514 = vsel %vm432, %v507, %v509
    %v515 = vsel %vm432, %v511, %v513
    %v520 = vadd.f32 %v411, %v514
    %v521 = vadd.f32 %v412, %v509
    %v522 = vadd.f32 %v413, %v515
    %v523 = vadd.f32 %v414, %v513
    %s524 = scalar_lea.vmem %s0, 32
    %v525 = vld [vmem:[%s524] sm:$0xff]
    %v526 = vld [vmem:[%s524 + $0x8] sm:$0xff]
    %v527 = vld [vmem:[%s524 + $0x10] sm:$0xff]
    %v528 = vld [vmem:[%s524 + $0x18] sm:$0xff]
    %v529 = vstv %s65
    %v530 = vmul.f32 %v525, %v529
    %v531 = vmul.f32 %v526, %v529
    %v532 = vmul.f32 %v527, %v529
    %v533 = vmul.f32 %v528, %v529
    %v534 = vadd.f32 %v439, %v530
    %v535 = vadd.f32 %v440, %v531
    %v536 = vadd.f32 %v441, %v532
    %v537 = vadd.f32 %v442, %v533
    %v538 = vstv %s82
    %v539 = vmul.f32 %v525, %v538
    %v540 = vmul.f32 %v526, %v538
    %v541 = vmul.f32 %v527, %v538
    %v542 = vmul.f32 %v528, %v538
    %v543 = vadd.f32 %v466, %v539
    %v544 = vadd.f32 %v467, %v540
    %v545 = vadd.f32 %v468, %v541
    %v546 = vadd.f32 %v469, %v542
    %v547 = vstv %s98
    %v548 = vmul.f32 %v525, %v547
    %v549 = vmul.f32 %v526, %v547
    %v550 = vmul.f32 %v527, %v547
    %v551 = vmul.f32 %v528, %v547
    %v552 = vadd.f32 %v493, %v548
    %v553 = vadd.f32 %v494, %v549
    %v554 = vadd.f32 %v495, %v550
    %v555 = vadd.f32 %v496, %v551
    %v556 = vstv %s114
    %v557 = vmul.f32 %v525, %v556
    %v558 = vmul.f32 %v526, %v556
    %v559 = vmul.f32 %v527, %v556
    %v560 = vmul.f32 %v528, %v556
    %v561 = vadd.f32 %v520, %v557
    %v562 = vadd.f32 %v521, %v558
    %v563 = vadd.f32 %v522, %v559
    %v564 = vadd.f32 %v523, %v560
    %v565 = vstv %s67
    %v566 = vmul.f32 %v525, %v565
    %v567 = vmul.f32 %v526, %v565
    %v568 = vmul.f32 %v527, %v565
    %v569 = vmul.f32 %v528, %v565
    %574 = vrot.lane.b32.xlu0 %v566, 127
    %v575 = vpop.permute.xlu0 %574
    %576 = vrot.lane.b32.xlu0 %v567, 127
    %v577 = vpop.permute.xlu0 %576
    %578 = vrot.lane.b32.xlu0 %v568, 127
    %v579 = vpop.permute.xlu0 %578
    %580 = vrot.lane.b32.xlu0 %v569, 127
    %v581 = vpop.permute.xlu0 %580
    %v582 = vsel %vm214, %v575, %v577
    %v583 = vsel %vm214, %v579, %v581
    %v588 = vadd.f32 %v534, %v582
    %v589 = vadd.f32 %v535, %v577
    %v590 = vadd.f32 %v536, %v583
    %v591 = vadd.f32 %v537, %v581
    %v592 = vstv %s84
    %v593 = vmul.f32 %v525, %v592
    %v594 = vmul.f32 %v526, %v592
    %v595 = vmul.f32 %v527, %v592
    %v596 = vmul.f32 %v528, %v592
    %601 = vrot.lane.b32.xlu0 %v593, 127
    %v602 = vpop.permute.xlu0 %601
    %603 = vrot.lane.b32.xlu0 %v594, 127
    %v604 = vpop.permute.xlu0 %603
    %605 = vrot.lane.b32.xlu0 %v595, 127
    %v606 = vpop.permute.xlu0 %605
    %607 = vrot.lane.b32.xlu0 %v596, 127
    %v608 = vpop.permute.xlu0 %607
    %v609 = vsel %vm214, %v602, %v604
    %v610 = vsel %vm214, %v606, %v608
    %v615 = vadd.f32 %v543, %v609
    %v616 = vadd.f32 %v544, %v604
    %v617 = vadd.f32 %v545, %v610
    %v618 = vadd.f32 %v546, %v608
    %v619 = vstv %s100
    %v620 = vmul.f32 %v525, %v619
    %v621 = vmul.f32 %v526, %v619
    %v622 = vmul.f32 %v527, %v619
    %v623 = vmul.f32 %v528, %v619
    %628 = vrot.lane.b32.xlu0 %v620, 127
    %v629 = vpop.permute.xlu0 %628
    %630 = vrot.lane.b32.xlu0 %v621, 127
    %v631 = vpop.permute.xlu0 %630
    %632 = vrot.lane.b32.xlu0 %v622, 127
    %v633 = vpop.permute.xlu0 %632
    %634 = vrot.lane.b32.xlu0 %v623, 127
    %v635 = vpop.permute.xlu0 %634
    %v636 = vsel %vm214, %v629, %v631
    %v637 = vsel %vm214, %v633, %v635
    %v642 = vadd.f32 %v552, %v636
    %v643 = vadd.f32 %v553, %v631
    %v644 = vadd.f32 %v554, %v637
    %v645 = vadd.f32 %v555, %v635
    %v646 = vstv %s116
    %v647 = vmul.f32 %v525, %v646
    %v648 = vmul.f32 %v526, %v646
    %v649 = vmul.f32 %v527, %v646
    %v650 = vmul.f32 %v528, %v646
    %655 = vrot.lane.b32.xlu0 %v647, 127
    %v656 = vpop.permute.xlu0 %655
    %657 = vrot.lane.b32.xlu0 %v648, 127
    %v658 = vpop.permute.xlu0 %657
    %659 = vrot.lane.b32.xlu0 %v649, 127
    %v660 = vpop.permute.xlu0 %659
    %661 = vrot.lane.b32.xlu0 %v650, 127
    %v662 = vpop.permute.xlu0 %661
    %v663 = vsel %vm214, %v656, %v658
    %v664 = vsel %vm214, %v660, %v662
    %v669 = vadd.f32 %v561, %v663
    %v670 = vadd.f32 %v562, %v658
    %v671 = vadd.f32 %v563, %v664
    %v672 = vadd.f32 %v564, %v662
    %v673 = vstv %s69
    %v674 = vmul.f32 %v525, %v673
    %v675 = vmul.f32 %v526, %v673
    %v676 = vmul.f32 %v527, %v673
    %v677 = vmul.f32 %v528, %v673
    %682 = vrot.lane.b32.xlu0 %v674, 126
    %v683 = vpop.permute.xlu0 %682
    %684 = vrot.lane.b32.xlu0 %v675, 126
    %v685 = vpop.permute.xlu0 %684
    %686 = vrot.lane.b32.xlu0 %v676, 126
    %v687 = vpop.permute.xlu0 %686
    %688 = vrot.lane.b32.xlu0 %v677, 126
    %v689 = vpop.permute.xlu0 %688
    %v690 = vsel %vm323, %v683, %v685
    %v691 = vsel %vm323, %v687, %v689
    %v696 = vadd.f32 %v588, %v690
    %v697 = vadd.f32 %v589, %v685
    %v698 = vadd.f32 %v590, %v691
    %v699 = vadd.f32 %v591, %v689
    %v700 = vstv %s86
    %v701 = vmul.f32 %v525, %v700
    %v702 = vmul.f32 %v526, %v700
    %v703 = vmul.f32 %v527, %v700
    %v704 = vmul.f32 %v528, %v700
    %709 = vrot.lane.b32.xlu0 %v701, 126
    %v710 = vpop.permute.xlu0 %709
    %711 = vrot.lane.b32.xlu0 %v702, 126
    %v712 = vpop.permute.xlu0 %711
    %713 = vrot.lane.b32.xlu0 %v703, 126
    %v714 = vpop.permute.xlu0 %713
    %715 = vrot.lane.b32.xlu0 %v704, 126
    %v716 = vpop.permute.xlu0 %715
    %v717 = vsel %vm323, %v710, %v712
    %v718 = vsel %vm323, %v714, %v716
    %v723 = vadd.f32 %v615, %v717
    %v724 = vadd.f32 %v616, %v712
    %v725 = vadd.f32 %v617, %v718
    %v726 = vadd.f32 %v618, %v716
    %v727 = vstv %s102
    %v728 = vmul.f32 %v525, %v727
    %v729 = vmul.f32 %v526, %v727
    %v730 = vmul.f32 %v527, %v727
    %v731 = vmul.f32 %v528, %v727
    %736 = vrot.lane.b32.xlu0 %v728, 126
    %v737 = vpop.permute.xlu0 %736
    %738 = vrot.lane.b32.xlu0 %v729, 126
    %v739 = vpop.permute.xlu0 %738
    %740 = vrot.lane.b32.xlu0 %v730, 126
    %v741 = vpop.permute.xlu0 %740
    %742 = vrot.lane.b32.xlu0 %v731, 126
    %v743 = vpop.permute.xlu0 %742
    %v744 = vsel %vm323, %v737, %v739
    %v745 = vsel %vm323, %v741, %v743
    %v750 = vadd.f32 %v642, %v744
    %v751 = vadd.f32 %v643, %v739
    %v752 = vadd.f32 %v644, %v745
    %v753 = vadd.f32 %v645, %v743
    %v754 = vstv %s118
    %v755 = vmul.f32 %v525, %v754
    %v756 = vmul.f32 %v526, %v754
    %v757 = vmul.f32 %v527, %v754
    %v758 = vmul.f32 %v528, %v754
    %763 = vrot.lane.b32.xlu0 %v755, 126
    %v764 = vpop.permute.xlu0 %763
    %765 = vrot.lane.b32.xlu0 %v756, 126
    %v766 = vpop.permute.xlu0 %765
    %767 = vrot.lane.b32.xlu0 %v757, 126
    %v768 = vpop.permute.xlu0 %767
    %769 = vrot.lane.b32.xlu0 %v758, 126
    %v770 = vpop.permute.xlu0 %769
    %v771 = vsel %vm323, %v764, %v766
    %v772 = vsel %vm323, %v768, %v770
    %v777 = vadd.f32 %v669, %v771
    %v778 = vadd.f32 %v670, %v766
    %v779 = vadd.f32 %v671, %v772
    %v780 = vadd.f32 %v672, %v770
    %v781 = vstv %s71
    %v782 = vmul.f32 %v525, %v781
    %v783 = vmul.f32 %v526, %v781
    %v784 = vmul.f32 %v527, %v781
    %v785 = vmul.f32 %v528, %v781
    %790 = vrot.lane.b32.xlu0 %v782, 125
    %v791 = vpop.permute.xlu0 %790
    %792 = vrot.lane.b32.xlu0 %v783, 125
    %v793 = vpop.permute.xlu0 %792
    %794 = vrot.lane.b32.xlu0 %v784, 125
    %v795 = vpop.permute.xlu0 %794
    %796 = vrot.lane.b32.xlu0 %v785, 125
    %v797 = vpop.permute.xlu0 %796
    %v798 = vsel %vm432, %v791, %v793
    %v799 = vsel %vm432, %v795, %v797
    %v804 = vadd.f32 %v696, %v798
    %v805 = vadd.f32 %v697, %v793
    %v806 = vadd.f32 %v698, %v799
    %v807 = vadd.f32 %v699, %v797
    %v808 = vstv %s88
    %v809 = vmul.f32 %v525, %v808
    %v810 = vmul.f32 %v526, %v808
    %v811 = vmul.f32 %v527, %v808
    %v812 = vmul.f32 %v528, %v808
    %817 = vrot.lane.b32.xlu0 %v809, 125
    %v818 = vpop.permute.xlu0 %817
    %819 = vrot.lane.b32.xlu0 %v810, 125
    %v820 = vpop.permute.xlu0 %819
    %821 = vrot.lane.b32.xlu0 %v811, 125
    %v822 = vpop.permute.xlu0 %821
    %823 = vrot.lane.b32.xlu0 %v812, 125
    %v824 = vpop.permute.xlu0 %823
    %v825 = vsel %vm432, %v818, %v820
    %v826 = vsel %vm432, %v822, %v824
    %v831 = vadd.f32 %v723, %v825
    %v832 = vadd.f32 %v724, %v820
    %v833 = vadd.f32 %v725, %v826
    %v834 = vadd.f32 %v726, %v824
    %v835 = vstv %s104
    %v836 = vmul.f32 %v525, %v835
    %v837 = vmul.f32 %v526, %v835
    %v838 = vmul.f32 %v527, %v835
    %v839 = vmul.f32 %v528, %v835
    %844 = vrot.lane.b32.xlu0 %v836, 125
    %v845 = vpop.permute.xlu0 %844
    %846 = vrot.lane.b32.xlu0 %v837, 125
    %v847 = vpop.permute.xlu0 %846
    %848 = vrot.lane.b32.xlu0 %v838, 125
    %v849 = vpop.permute.xlu0 %848
    %850 = vrot.lane.b32.xlu0 %v839, 125
    %v851 = vpop.permute.xlu0 %850
    %v852 = vsel %vm432, %v845, %v847
    %v853 = vsel %vm432, %v849, %v851
    %v858 = vadd.f32 %v750, %v852
    %v859 = vadd.f32 %v751, %v847
    %v860 = vadd.f32 %v752, %v853
    %v861 = vadd.f32 %v753, %v851
    %v862 = vstv %s120
    %v863 = vmul.f32 %v525, %v862
    %v864 = vmul.f32 %v526, %v862
    %v865 = vmul.f32 %v527, %v862
    %v866 = vmul.f32 %v528, %v862
    %871 = vrot.lane.b32.xlu0 %v863, 125
    %v872 = vpop.permute.xlu0 %871
    %873 = vrot.lane.b32.xlu0 %v864, 125
    %v874 = vpop.permute.xlu0 %873
    %875 = vrot.lane.b32.xlu0 %v865, 125
    %v876 = vpop.permute.xlu0 %875
    %877 = vrot.lane.b32.xlu0 %v866, 125
    %v878 = vpop.permute.xlu0 %877
    %v879 = vsel %vm432, %v872, %v874
    %v880 = vsel %vm432, %v876, %v878
    %v885 = vadd.f32 %v777, %v879
    %v886 = vadd.f32 %v778, %v874
    %v887 = vadd.f32 %v779, %v880
    %v888 = vadd.f32 %v780, %v878
    %s889 = scalar_lea.vmem %s0, 64
    %v890 = vld [vmem:[%s889] sm:$0xff]
    %v891 = vld [vmem:[%s889 + $0x8] sm:$0xff]
    %v892 = vld [vmem:[%s889 + $0x10] sm:$0xff]
    %v893 = vld [vmem:[%s889 + $0x18] sm:$0xff]
    %v894 = vstv %s72
    %v895 = vmul.f32 %v890, %v894
    %v896 = vmul.f32 %v891, %v894
    %v897 = vmul.f32 %v892, %v894
    %v898 = vmul.f32 %v893, %v894
    %v899 = vadd.f32 %v804, %v895
    %v900 = vadd.f32 %v805, %v896
    %v901 = vadd.f32 %v806, %v897
    %v902 = vadd.f32 %v807, %v898
    %v903 = vstv %s89
    %v904 = vmul.f32 %v890, %v903
    %v905 = vmul.f32 %v891, %v903
    %v906 = vmul.f32 %v892, %v903
    %v907 = vmul.f32 %v893, %v903
    %v908 = vadd.f32 %v831, %v904
    %v909 = vadd.f32 %v832, %v905
    %v910 = vadd.f32 %v833, %v906
    %v911 = vadd.f32 %v834, %v907
    %v912 = vstv %s105
    %v913 = vmul.f32 %v890, %v912
    %v914 = vmul.f32 %v891, %v912
    %v915 = vmul.f32 %v892, %v912
    %v916 = vmul.f32 %v893, %v912
    %v917 = vadd.f32 %v858, %v913
    %v918 = vadd.f32 %v859, %v914
    %v919 = vadd.f32 %v860, %v915
    %v920 = vadd.f32 %v861, %v916
    %v921 = vstv %s121
    %v922 = vmul.f32 %v890, %v921
    %v923 = vmul.f32 %v891, %v921
    %v924 = vmul.f32 %v892, %v921
    %v925 = vmul.f32 %v893, %v921
    %v926 = vadd.f32 %v885, %v922
    %v927 = vadd.f32 %v886, %v923
    %v928 = vadd.f32 %v887, %v924
    %v929 = vadd.f32 %v888, %v925
    %v930 = vstv %s74
    %v931 = vmul.f32 %v890, %v930
    %v932 = vmul.f32 %v891, %v930
    %v933 = vmul.f32 %v892, %v930
    %v934 = vmul.f32 %v893, %v930
    %939 = vrot.lane.b32.xlu0 %v931, 127
    %v940 = vpop.permute.xlu0 %939
    %941 = vrot.lane.b32.xlu0 %v932, 127
    %v942 = vpop.permute.xlu0 %941
    %943 = vrot.lane.b32.xlu0 %v933, 127
    %v944 = vpop.permute.xlu0 %943
    %945 = vrot.lane.b32.xlu0 %v934, 127
    %v946 = vpop.permute.xlu0 %945
    %v947 = vsel %vm214, %v940, %v942
    %v948 = vsel %vm214, %v944, %v946
    %v953 = vadd.f32 %v899, %v947
    %v954 = vadd.f32 %v900, %v942
    %v955 = vadd.f32 %v901, %v948
    %v956 = vadd.f32 %v902, %v946
    %v957 = vstv %s91
    %v958 = vmul.f32 %v890, %v957
    %v959 = vmul.f32 %v891, %v957
    %v960 = vmul.f32 %v892, %v957
    %v961 = vmul.f32 %v893, %v957
    %966 = vrot.lane.b32.xlu0 %v958, 127
    %v967 = vpop.permute.xlu0 %966
    %968 = vrot.lane.b32.xlu0 %v959, 127
    %v969 = vpop.permute.xlu0 %968
    %970 = vrot.lane.b32.xlu0 %v960, 127
    %v971 = vpop.permute.xlu0 %970
    %972 = vrot.lane.b32.xlu0 %v961, 127
    %v973 = vpop.permute.xlu0 %972
    %v974 = vsel %vm214, %v967, %v969
    %v975 = vsel %vm214, %v971, %v973
    %v980 = vadd.f32 %v908, %v974
    %v981 = vadd.f32 %v909, %v969
    %v982 = vadd.f32 %v910, %v975
    %v983 = vadd.f32 %v911, %v973
    %v984 = vstv %s107
    %v985 = vmul.f32 %v890, %v984
    %v986 = vmul.f32 %v891, %v984
    %v987 = vmul.f32 %v892, %v984
    %v988 = vmul.f32 %v893, %v984
    %993 = vrot.lane.b32.xlu0 %v985, 127
    %v994 = vpop.permute.xlu0 %993
    %995 = vrot.lane.b32.xlu0 %v986, 127
    %v996 = vpop.permute.xlu0 %995
    %997 = vrot.lane.b32.xlu0 %v987, 127
    %v998 = vpop.permute.xlu0 %997
    %999 = vrot.lane.b32.xlu0 %v988, 127
    %v1000 = vpop.permute.xlu0 %999
    %v1001 = vsel %vm214, %v994, %v996
    %v1002 = vsel %vm214, %v998, %v1000
    %v1007 = vadd.f32 %v917, %v1001
    %v1008 = vadd.f32 %v918, %v996
    %v1009 = vadd.f32 %v919, %v1002
    %v1010 = vadd.f32 %v920, %v1000
    %v1011 = vstv %s123
    %v1012 = vmul.f32 %v890, %v1011
    %v1013 = vmul.f32 %v891, %v1011
    %v1014 = vmul.f32 %v892, %v1011
    %v1015 = vmul.f32 %v893, %v1011
    %1020 = vrot.lane.b32.xlu0 %v1012, 127
    %v1021 = vpop.permute.xlu0 %1020
    %1022 = vrot.lane.b32.xlu0 %v1013, 127
    %v1023 = vpop.permute.xlu0 %1022
    %1024 = vrot.lane.b32.xlu0 %v1014, 127
    %v1025 = vpop.permute.xlu0 %1024
    %1026 = vrot.lane.b32.xlu0 %v1015, 127
    %v1027 = vpop.permute.xlu0 %1026
    %v1028 = vsel %vm214, %v1021, %v1023
    %v1029 = vsel %vm214, %v1025, %v1027
    %v1034 = vadd.f32 %v926, %v1028
    %v1035 = vadd.f32 %v927, %v1023
    %v1036 = vadd.f32 %v928, %v1029
    %v1037 = vadd.f32 %v929, %v1027
    %v1038 = vstv %s76
    %v1039 = vmul.f32 %v890, %v1038
    %v1040 = vmul.f32 %v891, %v1038
    %v1041 = vmul.f32 %v892, %v1038
    %v1042 = vmul.f32 %v893, %v1038
    %1047 = vrot.lane.b32.xlu0 %v1039, 126
    %v1048 = vpop.permute.xlu0 %1047
    %1049 = vrot.lane.b32.xlu0 %v1040, 126
    %v1050 = vpop.permute.xlu0 %1049
    %1051 = vrot.lane.b32.xlu0 %v1041, 126
    %v1052 = vpop.permute.xlu0 %1051
    %1053 = vrot.lane.b32.xlu0 %v1042, 126
    %v1054 = vpop.permute.xlu0 %1053
    %v1055 = vsel %vm323, %v1048, %v1050
    %v1056 = vsel %vm323, %v1052, %v1054
    %v1061 = vadd.f32 %v953, %v1055
    %v1062 = vadd.f32 %v954, %v1050
    %v1063 = vadd.f32 %v955, %v1056
    %v1064 = vadd.f32 %v956, %v1054
    %v1065 = vstv %s93
    %v1066 = vmul.f32 %v890, %v1065
    %v1067 = vmul.f32 %v891, %v1065
    %v1068 = vmul.f32 %v892, %v1065
    %v1069 = vmul.f32 %v893, %v1065
    %1074 = vrot.lane.b32.xlu0 %v1066, 126
    %v1075 = vpop.permute.xlu0 %1074
    %1076 = vrot.lane.b32.xlu0 %v1067, 126
    %v1077 = vpop.permute.xlu0 %1076
    %1078 = vrot.lane.b32.xlu0 %v1068, 126
    %v1079 = vpop.permute.xlu0 %1078
    %1080 = vrot.lane.b32.xlu0 %v1069, 126
    %v1081 = vpop.permute.xlu0 %1080
    %v1082 = vsel %vm323, %v1075, %v1077
    %v1083 = vsel %vm323, %v1079, %v1081
    %v1088 = vadd.f32 %v980, %v1082
    %v1089 = vadd.f32 %v981, %v1077
    %v1090 = vadd.f32 %v982, %v1083
    %v1091 = vadd.f32 %v983, %v1081
    %v1092 = vstv %s109
    %v1093 = vmul.f32 %v890, %v1092
    %v1094 = vmul.f32 %v891, %v1092
    %v1095 = vmul.f32 %v892, %v1092
    %v1096 = vmul.f32 %v893, %v1092
    %1101 = vrot.lane.b32.xlu0 %v1093, 126
    %v1102 = vpop.permute.xlu0 %1101
    %1103 = vrot.lane.b32.xlu0 %v1094, 126
    %v1104 = vpop.permute.xlu0 %1103
    %1105 = vrot.lane.b32.xlu0 %v1095, 126
    %v1106 = vpop.permute.xlu0 %1105
    %1107 = vrot.lane.b32.xlu0 %v1096, 126
    %v1108 = vpop.permute.xlu0 %1107
    %v1109 = vsel %vm323, %v1102, %v1104
    %v1110 = vsel %vm323, %v1106, %v1108
    %v1115 = vadd.f32 %v1007, %v1109
    %v1116 = vadd.f32 %v1008, %v1104
    %v1117 = vadd.f32 %v1009, %v1110
    %v1118 = vadd.f32 %v1010, %v1108
    %v1119 = vstv %s125
    %v1120 = vmul.f32 %v890, %v1119
    %v1121 = vmul.f32 %v891, %v1119
    %v1122 = vmul.f32 %v892, %v1119
    %v1123 = vmul.f32 %v893, %v1119
    %1128 = vrot.lane.b32.xlu0 %v1120, 126
    %v1129 = vpop.permute.xlu0 %1128
    %1130 = vrot.lane.b32.xlu0 %v1121, 126
    %v1131 = vpop.permute.xlu0 %1130
    %1132 = vrot.lane.b32.xlu0 %v1122, 126
    %v1133 = vpop.permute.xlu0 %1132
    %1134 = vrot.lane.b32.xlu0 %v1123, 126
    %v1135 = vpop.permute.xlu0 %1134
    %v1136 = vsel %vm323, %v1129, %v1131
    %v1137 = vsel %vm323, %v1133, %v1135
    %v1142 = vadd.f32 %v1034, %v1136
    %v1143 = vadd.f32 %v1035, %v1131
    %v1144 = vadd.f32 %v1036, %v1137
    %v1145 = vadd.f32 %v1037, %v1135
    %v1146 = vstv %s78
    %v1147 = vmul.f32 %v890, %v1146
    %v1148 = vmul.f32 %v891, %v1146
    %v1149 = vmul.f32 %v892, %v1146
    %v1150 = vmul.f32 %v893, %v1146
    %1155 = vrot.lane.b32.xlu0 %v1147, 125
    %v1156 = vpop.permute.xlu0 %1155
    %1157 = vrot.lane.b32.xlu0 %v1148, 125
    %v1158 = vpop.permute.xlu0 %1157
    %1159 = vrot.lane.b32.xlu0 %v1149, 125
    %v1160 = vpop.permute.xlu0 %1159
    %1161 = vrot.lane.b32.xlu0 %v1150, 125
    %v1162 = vpop.permute.xlu0 %1161
    %v1163 = vsel %vm432, %v1156, %v1158
    %v1164 = vsel %vm432, %v1160, %v1162
    %v1169 = vadd.f32 %v1061, %v1163
    %v1170 = vadd.f32 %v1062, %v1158
    %v1171 = vadd.f32 %v1063, %v1164
    %v1172 = vadd.f32 %v1064, %v1162
    %v1173 = vstv %s95
    %v1174 = vmul.f32 %v890, %v1173
    %v1175 = vmul.f32 %v891, %v1173
    %v1176 = vmul.f32 %v892, %v1173
    %v1177 = vmul.f32 %v893, %v1173
    %1182 = vrot.lane.b32.xlu0 %v1174, 125
    %v1183 = vpop.permute.xlu0 %1182
    %1184 = vrot.lane.b32.xlu0 %v1175, 125
    %v1185 = vpop.permute.xlu0 %1184
    %1186 = vrot.lane.b32.xlu0 %v1176, 125
    %v1187 = vpop.permute.xlu0 %1186
    %1188 = vrot.lane.b32.xlu0 %v1177, 125
    %v1189 = vpop.permute.xlu0 %1188
    %v1190 = vsel %vm432, %v1183, %v1185
    %v1191 = vsel %vm432, %v1187, %v1189
    %v1196 = vadd.f32 %v1088, %v1190
    %v1197 = vadd.f32 %v1089, %v1185
    %v1198 = vadd.f32 %v1090, %v1191
    %v1199 = vadd.f32 %v1091, %v1189
    %v1200 = vstv %s111
    %v1201 = vmul.f32 %v890, %v1200
    %v1202 = vmul.f32 %v891, %v1200
    %v1203 = vmul.f32 %v892, %v1200
    %v1204 = vmul.f32 %v893, %v1200
    %1209 = vrot.lane.b32.xlu0 %v1201, 125
    %v1210 = vpop.permute.xlu0 %1209
    %1211 = vrot.lane.b32.xlu0 %v1202, 125
    %v1212 = vpop.permute.xlu0 %1211
    %1213 = vrot.lane.b32.xlu0 %v1203, 125
    %v1214 = vpop.permute.xlu0 %1213
    %1215 = vrot.lane.b32.xlu0 %v1204, 125
    %v1216 = vpop.permute.xlu0 %1215
    %v1217 = vsel %vm432, %v1210, %v1212
    %v1218 = vsel %vm432, %v1214, %v1216
    %v1223 = vadd.f32 %v1115, %v1217
    %v1224 = vadd.f32 %v1116, %v1212
    %v1225 = vadd.f32 %v1117, %v1218
    %v1226 = vadd.f32 %v1118, %v1216
    %v1227 = vstv %s127
    %v1228 = vmul.f32 %v890, %v1227
    %v1229 = vmul.f32 %v891, %v1227
    %v1230 = vmul.f32 %v892, %v1227
    %v1231 = vmul.f32 %v893, %v1227
    %1236 = vrot.lane.b32.xlu0 %v1228, 125
    %v1237 = vpop.permute.xlu0 %1236
    %1238 = vrot.lane.b32.xlu0 %v1229, 125
    %v1239 = vpop.permute.xlu0 %1238
    %1240 = vrot.lane.b32.xlu0 %v1230, 125
    %v1241 = vpop.permute.xlu0 %1240
    %1242 = vrot.lane.b32.xlu0 %v1231, 125
    %v1243 = vpop.permute.xlu0 %1242
    %v1244 = vsel %vm432, %v1237, %v1239
    %v1245 = vsel %vm432, %v1241, %v1243
    %v1250 = vadd.f32 %v1142, %v1244
    %v1251 = vadd.f32 %v1143, %v1239
    %v1252 = vadd.f32 %v1144, %v1245
    %v1253 = vadd.f32 %v1145, %v1243
    %s1254 = scalar_lea.vmem %s0, 96
    %v1255 = vld [vmem:[%s1254] sm:$0xff]
    %v1256 = vld [vmem:[%s1254 + $0x8] sm:$0xff]
    %v1257 = vld [vmem:[%s1254 + $0x10] sm:$0xff]
    %v1258 = vld [vmem:[%s1254 + $0x18] sm:$0xff]
    %v1259 = vstv %s73
    %v1260 = vmul.f32 %v1255, %v1259
    %v1261 = vmul.f32 %v1256, %v1259
    %v1262 = vmul.f32 %v1257, %v1259
    %v1263 = vmul.f32 %v1258, %v1259
    %v1264 = vadd.f32 %v1169, %v1260
    %v1265 = vadd.f32 %v1170, %v1261
    %v1266 = vadd.f32 %v1171, %v1262
    %v1267 = vadd.f32 %v1172, %v1263
    %v1268 = vstv %s90
    %v1269 = vmul.f32 %v1255, %v1268
    %v1270 = vmul.f32 %v1256, %v1268
    %v1271 = vmul.f32 %v1257, %v1268
    %v1272 = vmul.f32 %v1258, %v1268
    %v1273 = vadd.f32 %v1196, %v1269
    %v1274 = vadd.f32 %v1197, %v1270
    %v1275 = vadd.f32 %v1198, %v1271
    %v1276 = vadd.f32 %v1199, %v1272
    %v1277 = vstv %s106
    %v1278 = vmul.f32 %v1255, %v1277
    %v1279 = vmul.f32 %v1256, %v1277
    %v1280 = vmul.f32 %v1257, %v1277
    %v1281 = vmul.f32 %v1258, %v1277
    %v1282 = vadd.f32 %v1223, %v1278
    %v1283 = vadd.f32 %v1224, %v1279
    %v1284 = vadd.f32 %v1225, %v1280
    %v1285 = vadd.f32 %v1226, %v1281
    %v1286 = vstv %s122
    %v1287 = vmul.f32 %v1255, %v1286
    %v1288 = vmul.f32 %v1256, %v1286
    %v1289 = vmul.f32 %v1257, %v1286
    %v1290 = vmul.f32 %v1258, %v1286
    %v1291 = vadd.f32 %v1250, %v1287
    %v1292 = vadd.f32 %v1251, %v1288
    %v1293 = vadd.f32 %v1252, %v1289
    %v1294 = vadd.f32 %v1253, %v1290
    %v1295 = vstv %s75
    %v1296 = vmul.f32 %v1255, %v1295
    %v1297 = vmul.f32 %v1256, %v1295
    %v1298 = vmul.f32 %v1257, %v1295
    %v1299 = vmul.f32 %v1258, %v1295
    %1304 = vrot.lane.b32.xlu0 %v1296, 127
    %v1305 = vpop.permute.xlu0 %1304
    %1306 = vrot.lane.b32.xlu0 %v1297, 127
    %v1307 = vpop.permute.xlu0 %1306
    %1308 = vrot.lane.b32.xlu0 %v1298, 127
    %v1309 = vpop.permute.xlu0 %1308
    %1310 = vrot.lane.b32.xlu0 %v1299, 127
    %v1311 = vpop.permute.xlu0 %1310
    %v1312 = vsel %vm214, %v1305, %v1307
    %v1313 = vsel %vm214, %v1309, %v1311
    %v1318 = vadd.f32 %v1264, %v1312
    %v1319 = vadd.f32 %v1265, %v1307
    %v1320 = vadd.f32 %v1266, %v1313
    %v1321 = vadd.f32 %v1267, %v1311
    %v1322 = vstv %s92
    %v1323 = vmul.f32 %v1255, %v1322
    %v1324 = vmul.f32 %v1256, %v1322
    %v1325 = vmul.f32 %v1257, %v1322
    %v1326 = vmul.f32 %v1258, %v1322
    %1331 = vrot.lane.b32.xlu0 %v1323, 127
    %v1332 = vpop.permute.xlu0 %1331
    %1333 = vrot.lane.b32.xlu0 %v1324, 127
    %v1334 = vpop.permute.xlu0 %1333
    %1335 = vrot.lane.b32.xlu0 %v1325, 127
    %v1336 = vpop.permute.xlu0 %1335
    %1337 = vrot.lane.b32.xlu0 %v1326, 127
    %v1338 = vpop.permute.xlu0 %1337
    %v1339 = vsel %vm214, %v1332, %v1334
    %v1340 = vsel %vm214, %v1336, %v1338
    %v1345 = vadd.f32 %v1273, %v1339
    %v1346 = vadd.f32 %v1274, %v1334
    %v1347 = vadd.f32 %v1275, %v1340
    %v1348 = vadd.f32 %v1276, %v1338
    %v1349 = vstv %s108
    %v1350 = vmul.f32 %v1255, %v1349
    %v1351 = vmul.f32 %v1256, %v1349
    %v1352 = vmul.f32 %v1257, %v1349
    %v1353 = vmul.f32 %v1258, %v1349
    %1358 = vrot.lane.b32.xlu0 %v1350, 127
    %v1359 = vpop.permute.xlu0 %1358
    %1360 = vrot.lane.b32.xlu0 %v1351, 127
    %v1361 = vpop.permute.xlu0 %1360
    %1362 = vrot.lane.b32.xlu0 %v1352, 127
    %v1363 = vpop.permute.xlu0 %1362
    %1364 = vrot.lane.b32.xlu0 %v1353, 127
    %v1365 = vpop.permute.xlu0 %1364
    %v1366 = vsel %vm214, %v1359, %v1361
    %v1367 = vsel %vm214, %v1363, %v1365
    %v1372 = vadd.f32 %v1282, %v1366
    %v1373 = vadd.f32 %v1283, %v1361
    %v1374 = vadd.f32 %v1284, %v1367
    %v1375 = vadd.f32 %v1285, %v1365
    %v1376 = vstv %s124
    %v1377 = vmul.f32 %v1255, %v1376
    %v1378 = vmul.f32 %v1256, %v1376
    %v1379 = vmul.f32 %v1257, %v1376
    %v1380 = vmul.f32 %v1258, %v1376
    %1385 = vrot.lane.b32.xlu0 %v1377, 127
    %v1386 = vpop.permute.xlu0 %1385
    %1387 = vrot.lane.b32.xlu0 %v1378, 127
    %v1388 = vpop.permute.xlu0 %1387
    %1389 = vrot.lane.b32.xlu0 %v1379, 127
    %v1390 = vpop.permute.xlu0 %1389
    %1391 = vrot.lane.b32.xlu0 %v1380, 127
    %v1392 = vpop.permute.xlu0 %1391
    %v1393 = vsel %vm214, %v1386, %v1388
    %v1394 = vsel %vm214, %v1390, %v1392
    %v1399 = vadd.f32 %v1291, %v1393
    %v1400 = vadd.f32 %v1292, %v1388
    %v1401 = vadd.f32 %v1293, %v1394
    %v1402 = vadd.f32 %v1294, %v1392
    %v1403 = vstv %s77
    %v1404 = vmul.f32 %v1255, %v1403
    %v1405 = vmul.f32 %v1256, %v1403
    %v1406 = vmul.f32 %v1257, %v1403
    %v1407 = vmul.f32 %v1258, %v1403
    %1412 = vrot.lane.b32.xlu0 %v1404, 126
    %v1413 = vpop.permute.xlu0 %1412
    %1414 = vrot.lane.b32.xlu0 %v1405, 126
    %v1415 = vpop.permute.xlu0 %1414
    %1416 = vrot.lane.b32.xlu0 %v1406, 126
    %v1417 = vpop.permute.xlu0 %1416
    %1418 = vrot.lane.b32.xlu0 %v1407, 126
    %v1419 = vpop.permute.xlu0 %1418
    %v1420 = vsel %vm323, %v1413, %v1415
    %v1421 = vsel %vm323, %v1417, %v1419
    %v1426 = vadd.f32 %v1318, %v1420
    %v1427 = vadd.f32 %v1319, %v1415
    %v1428 = vadd.f32 %v1320, %v1421
    %v1429 = vadd.f32 %v1321, %v1419
    %v1430 = vstv %s94
    %v1431 = vmul.f32 %v1255, %v1430
    %v1432 = vmul.f32 %v1256, %v1430
    %v1433 = vmul.f32 %v1257, %v1430
    %v1434 = vmul.f32 %v1258, %v1430
    %1439 = vrot.lane.b32.xlu0 %v1431, 126
    %v1440 = vpop.permute.xlu0 %1439
    %1441 = vrot.lane.b32.xlu0 %v1432, 126
    %v1442 = vpop.permute.xlu0 %1441
    %1443 = vrot.lane.b32.xlu0 %v1433, 126
    %v1444 = vpop.permute.xlu0 %1443
    %1445 = vrot.lane.b32.xlu0 %v1434, 126
    %v1446 = vpop.permute.xlu0 %1445
    %v1447 = vsel %vm323, %v1440, %v1442
    %v1448 = vsel %vm323, %v1444, %v1446
    %v1453 = vadd.f32 %v1345, %v1447
    %v1454 = vadd.f32 %v1346, %v1442
    %v1455 = vadd.f32 %v1347, %v1448
    %v1456 = vadd.f32 %v1348, %v1446
    %v1457 = vstv %s110
    %v1458 = vmul.f32 %v1255, %v1457
    %v1459 = vmul.f32 %v1256, %v1457
    %v1460 = vmul.f32 %v1257, %v1457
    %v1461 = vmul.f32 %v1258, %v1457
    %1466 = vrot.lane.b32.xlu0 %v1458, 126
    %v1467 = vpop.permute.xlu0 %1466
    %1468 = vrot.lane.b32.xlu0 %v1459, 126
    %v1469 = vpop.permute.xlu0 %1468
    %1470 = vrot.lane.b32.xlu0 %v1460, 126
    %v1471 = vpop.permute.xlu0 %1470
    %1472 = vrot.lane.b32.xlu0 %v1461, 126
    %v1473 = vpop.permute.xlu0 %1472
    %v1474 = vsel %vm323, %v1467, %v1469
    %v1475 = vsel %vm323, %v1471, %v1473
    %v1480 = vadd.f32 %v1372, %v1474
    %v1481 = vadd.f32 %v1373, %v1469
    %v1482 = vadd.f32 %v1374, %v1475
    %v1483 = vadd.f32 %v1375, %v1473
    %v1484 = vstv %s126
    %v1485 = vmul.f32 %v1255, %v1484
    %v1486 = vmul.f32 %v1256, %v1484
    %v1487 = vmul.f32 %v1257, %v1484
    %v1488 = vmul.f32 %v1258, %v1484
    %1493 = vrot.lane.b32.xlu0 %v1485, 126
    %v1494 = vpop.permute.xlu0 %1493
    %1495 = vrot.lane.b32.xlu0 %v1486, 126
    %v1496 = vpop.permute.xlu0 %1495
    %1497 = vrot.lane.b32.xlu0 %v1487, 126
    %v1498 = vpop.permute.xlu0 %1497
    %1499 = vrot.lane.b32.xlu0 %v1488, 126
    %v1500 = vpop.permute.xlu0 %1499
    %v1501 = vsel %vm323, %v1494, %v1496
    %v1502 = vsel %vm323, %v1498, %v1500
    %v1507 = vadd.f32 %v1399, %v1501
    %v1508 = vadd.f32 %v1400, %v1496
    %v1509 = vadd.f32 %v1401, %v1502
    %v1510 = vadd.f32 %v1402, %v1500
    %v1511 = vstv %s79
    %v1512 = vmul.f32 %v1255, %v1511
    %v1513 = vmul.f32 %v1256, %v1511
    %v1514 = vmul.f32 %v1257, %v1511
    %v1515 = vmul.f32 %v1258, %v1511
    %1520 = vrot.lane.b32.xlu0 %v1512, 125
    %v1521 = vpop.permute.xlu0 %1520
    %1522 = vrot.lane.b32.xlu0 %v1513, 125
    %v1523 = vpop.permute.xlu0 %1522
    %1524 = vrot.lane.b32.xlu0 %v1514, 125
    %v1525 = vpop.permute.xlu0 %1524
    %1526 = vrot.lane.b32.xlu0 %v1515, 125
    %v1527 = vpop.permute.xlu0 %1526
    %v1528 = vsel %vm432, %v1521, %v1523
    %v1529 = vsel %vm432, %v1525, %v1527
    %v1534 = vadd.f32 %v1426, %v1528
    %v1535 = vadd.f32 %v1427, %v1523
    %v1536 = vadd.f32 %v1428, %v1529
    %v1537 = vadd.f32 %v1429, %v1527
    %v1538 = vstv %s96
    %v1539 = vmul.f32 %v1255, %v1538
    %v1540 = vmul.f32 %v1256, %v1538
    %v1541 = vmul.f32 %v1257, %v1538
    %v1542 = vmul.f32 %v1258, %v1538
    %1547 = vrot.lane.b32.xlu0 %v1539, 125
    %v1548 = vpop.permute.xlu0 %1547
    %1549 = vrot.lane.b32.xlu0 %v1540, 125
    %v1550 = vpop.permute.xlu0 %1549
    %1551 = vrot.lane.b32.xlu0 %v1541, 125
    %v1552 = vpop.permute.xlu0 %1551
    %1553 = vrot.lane.b32.xlu0 %v1542, 125
    %v1554 = vpop.permute.xlu0 %1553
    %v1555 = vsel %vm432, %v1548, %v1550
    %v1556 = vsel %vm432, %v1552, %v1554
    %v1561 = vadd.f32 %v1453, %v1555
    %v1562 = vadd.f32 %v1454, %v1550
    %v1563 = vadd.f32 %v1455, %v1556
    %v1564 = vadd.f32 %v1456, %v1554
    %v1565 = vstv %s112
    %v1566 = vmul.f32 %v1255, %v1565
    %v1567 = vmul.f32 %v1256, %v1565
    %v1568 = vmul.f32 %v1257, %v1565
    %v1569 = vmul.f32 %v1258, %v1565
    %1574 = vrot.lane.b32.xlu0 %v1566, 125
    %v1575 = vpop.permute.xlu0 %1574
    %1576 = vrot.lane.b32.xlu0 %v1567, 125
    %v1577 = vpop.permute.xlu0 %1576
    %1578 = vrot.lane.b32.xlu0 %v1568, 125
    %v1579 = vpop.permute.xlu0 %1578
    %1580 = vrot.lane.b32.xlu0 %v1569, 125
    %v1581 = vpop.permute.xlu0 %1580
    %v1582 = vsel %vm432, %v1575, %v1577
    %v1583 = vsel %vm432, %v1579, %v1581
    %v1588 = vadd.f32 %v1480, %v1582
    %v1589 = vadd.f32 %v1481, %v1577
    %v1590 = vadd.f32 %v1482, %v1583
    %v1591 = vadd.f32 %v1483, %v1581
    %v1592 = vstv %s128
    %v1593 = vmul.f32 %v1255, %v1592
    %v1594 = vmul.f32 %v1256, %v1592
    %v1595 = vmul.f32 %v1257, %v1592
    %v1596 = vmul.f32 %v1258, %v1592
    %1601 = vrot.lane.b32.xlu0 %v1593, 125
    %v1602 = vpop.permute.xlu0 %1601
    %1603 = vrot.lane.b32.xlu0 %v1594, 125
    %v1604 = vpop.permute.xlu0 %1603
    %1605 = vrot.lane.b32.xlu0 %v1595, 125
    %v1606 = vpop.permute.xlu0 %1605
    %1607 = vrot.lane.b32.xlu0 %v1596, 125
    %v1608 = vpop.permute.xlu0 %1607
    %v1609 = vsel %vm432, %v1602, %v1604
    %v1610 = vsel %vm432, %v1606, %v1608
    %v1615 = vadd.f32 %v1507, %v1609
    %v1616 = vadd.f32 %v1508, %v1604
    %v1617 = vadd.f32 %v1509, %v1610
    %v1618 = vadd.f32 %v1510, %v1608
    %v1619 = vand.u32 2147483647, %v1534
    %v1620 = vand.u32 2147483647, %v1535
    %v1621 = vand.u32 2147483647, %v1536
    %v1622 = vand.u32 2147483647, %v1537
    %vm1623 = vcmask 23552
    %v1625 = vsel %vm1623, %v1620, 0
    %v1628 = vsel %vm1623, %v1622, 0
    %vm1630 = vcmask 1042432
    %v1632 = vsel %vm1630, %v148, 0
    %1634 = vmatprep.subr.mxu0 0.0
    %1635 = vmatpush1.msra.mxu0 %v132
    %1636 = vmatprep.subr.mxu0 0.0
    %1637 = vmatpush1.msra.mxu0 %v133
    %1638 = vmatprep.subr.mxu0 0.0
    %1639 = vmatpush1.msra.mxu0 %v134
    %1640 = vmatprep.subr.mxu0 0.0
    %1641 = vmatpush1.msra.mxu0 %v135
    %1642 = vmatprep.subr.mxu0 0.0
    %1643 = vmatpush1.msra.mxu0 %v136
    %1644 = vmatprep.subr.mxu0 0.0
    %1645 = vmatpush1.msra.mxu0 %v137
    %1646 = vmatprep.subr.mxu0 0.0
    %1647 = vmatpush1.msra.mxu0 %v138
    %1648 = vmatprep.subr.mxu0 0.0
    %1649 = vmatpush1.msra.mxu0 %v139
    %1650 = vmatprep.subr.mxu0 0.0
    %1651 = vmatpush1.msra.mxu0 %v140
    %1652 = vmatprep.subr.mxu0 0.0
    %1653 = vmatpush1.msra.mxu0 %v141
    %1654 = vmatprep.subr.mxu0 0.0
    %1655 = vmatpush1.msra.mxu0 %v142
    %1656 = vmatprep.subr.mxu0 0.0
    %1657 = vmatpush1.msra.mxu0 %v143
    %1658 = vmatprep.subr.mxu0 0.0
    %1659 = vmatpush1.msra.mxu0 %v144
    %1660 = vmatprep.subr.mxu0 0.0
    %1661 = vmatpush1.msra.mxu0 %v145
    %1662 = vmatprep.subr.mxu0 0.0
    %1663 = vmatpush1.msra.mxu0 %v146
    %1664 = vmatprep.subr.mxu0 0.0
    %1665 = vmatpush1.msra.mxu0 %v147
    %1666 = vmatprep.subr.mxu0 0.0
    %1667 = vmatpush1.msra.mxu0 %v1632
    %1668 = vmatprep.subr.mxu0 0.0
    %1669 = vmatpush1.msra.mxu0 0.0
    %1670 = vmatprep.subr.mxu0 0.0
    %1671 = vmatpush1.msra.mxu0 0.0
    %1672 = vmatprep.subr.mxu0 0.0
    %1673 = vmatpush1.msra.mxu0 0.0
    %1674 = vmatprep.subr.mxu0 0.0
    %1675 = vmatpush1.msra.mxu0 0.0
    %1676 = vmatprep.subr.mxu0 0.0
    %1677 = vmatpush1.msra.mxu0 0.0
    %1678 = vmatprep.subr.mxu0 0.0
    %1679 = vmatpush1.msra.mxu0 0.0
    %1680 = vmatprep.subr.mxu0 0.0
    %1681 = vmatpush1.msra.mxu0 0.0
    %1682 = vmatprep.subr.mxu0 0.0
    %1683 = vmatpush1.msra.mxu0 0.0
    %1684 = vmatprep.subr.mxu0 0.0
    %1685 = vmatpush1.msra.mxu0 0.0
    %1686 = vmatprep.subr.mxu0 0.0
    %1687 = vmatpush1.msra.mxu0 0.0
    %1688 = vmatprep.subr.mxu0 0.0
    %1689 = vmatpush1.msra.mxu0 0.0
    %1690 = vmatprep.subr.mxu0 0.0
    %1691 = vmatpush1.msra.mxu0 0.0
    %1692 = vmatprep.subr.mxu0 0.0
    %1693 = vmatpush1.msra.mxu0 0.0
    %1694 = vmatprep.subr.mxu0 0.0
    %1695 = vmatpush1.msra.mxu0 0.0
    %1696 = vmatprep.subr.mxu0 0.0
    %1697 = vmatpush1.msra.mxu0 0.0
    %1698 = vmatprep.mubr.f32.mxu0 %v1625
    %1699 = vmatmul.mubr.f32.gmra.mrb[0].mxu0 %v1619
    %v1700 = vpop.f32.mrb[0].mxu0
    %v1701 = vadd.f32 0.0, %v1700
    %v1702 = vpop.f32.mrb[0].mxu0
    %1703 = vmatprep.mubr.f32.mxu0 %v1628
    %1704 = vmatmul.mubr.f32.gmra.mrb[0].mxu0 %v1621
    %v1705 = vpop.f32.mrb[0].mxu0
    %v1706 = vadd.f32 0.0, %v1705
    %v1707 = vpop.f32.mrb[0].mxu0
    %1708 = vdwg.mxu0
    %1709 = vxpose.xlu0.b32.start [1/16] %v1701, 128
    %1710 = vxpose.xlu0.b32.cont [2/16] %v1706, 128
    %1711 = vxpose.xlu0.b32.cont [3/16] 0.0, 128
    %1712 = vxpose.xlu0.b32.cont [4/16] 0.0, 128
    %1713 = vxpose.xlu0.b32.cont [5/16] 0.0, 128
    %1714 = vxpose.xlu0.b32.cont [6/16] 0.0, 128
    %1715 = vxpose.xlu0.b32.cont [7/16] 0.0, 128
    %1716 = vxpose.xlu0.b32.cont [8/16] 0.0, 128
    %1717 = vxpose.xlu0.b32.cont [9/16] 0.0, 128
    %1718 = vxpose.xlu0.b32.cont [10/16] 0.0, 128
    %1719 = vxpose.xlu0.b32.cont [11/16] 0.0, 128
    %1720 = vxpose.xlu0.b32.cont [12/16] 0.0, 128
    %1721 = vxpose.xlu0.b32.cont [13/16] 0.0, 128
    %1722 = vxpose.xlu0.b32.cont [14/16] 0.0, 128
    %1723 = vxpose.xlu0.b32.cont [15/16] 0.0, 128
    %1724 = vxpose.xlu0.b32.end [16/16] 0.0, 128
    %v1725 = vpop.trf.xlu0
    %v1726 = vpop.trf.xlu0
    %v1727 = vpop.trf.xlu0
    %v1728 = vpop.trf.xlu0
    %v1729 = vpop.trf.xlu0
    %v1730 = vpop.trf.xlu0
    %v1731 = vpop.trf.xlu0
    %v1732 = vpop.trf.xlu0
    %v1733 = vpop.trf.xlu0
    %v1734 = vpop.trf.xlu0
    %v1735 = vpop.trf.xlu0
    %v1736 = vpop.trf.xlu0
    %v1737 = vpop.trf.xlu0
    %v1738 = vpop.trf.xlu0
    %v1739 = vpop.trf.xlu0
    %v1740 = vpop.trf.xlu0
    %vm1741 = vcmask 130048
    %1742 = vst.msk [vmem:[#allocation9] sm:$0xff] %vm1741, %v1725
    %1743 = vst [vmem:[#allocation10] sm:$0xff] %v1561
    %1744 = vst.msk [vmem:[#allocation10 + $0x8] sm:$0xff] %vm1623, %v1562
    %1745 = vst [vmem:[#allocation10 + $0x10] sm:$0xff] %v1563
    %1746 = vst.msk [vmem:[#allocation10 + $0x18] sm:$0xff] %vm1623, %v1564
    %s1747 = scalar_lea.vmem [#allocation10], 32
    %1748 = vst [vmem:[%s1747] sm:$0xff] %v1588
    %1749 = vst.msk [vmem:[%s1747 + $0x8] sm:$0xff] %vm1623, %v1589
    %1750 = vst [vmem:[%s1747 + $0x10] sm:$0xff] %v1590
    %1751 = vst.msk [vmem:[%s1747 + $0x18] sm:$0xff] %vm1623, %v1591
    %s1752 = scalar_lea.vmem [#allocation10], 64
    %1753 = vst [vmem:[%s1752] sm:$0xff] %v1615
    %1754 = vst.msk [vmem:[%s1752 + $0x8] sm:$0xff] %vm1623, %v1616
    %1755 = vst [vmem:[%s1752 + $0x10] sm:$0xff] %v1617
    %1756 = vst.msk [vmem:[%s1752 + $0x18] sm:$0xff] %vm1623, %v1618
    // Predicated region
    $region38: #{wavelet_convolution_forward.1} parent=1 // pred_check
      _
    $region39: #{wavelet_convolution_forward.1} parent=1 // pred_check_branch
      %1758 = sbr.rel (0) target = $region41
    $region40: #{wavelet_convolution_forward.1} parent=1 // pred_region
      %s1760 = ssub.s32 128, 128
      %1761 = vsyncadd [#allocation4], %s1760
      %s1763 = sshll.u32 [#allocation9], 4
      %s1764 = int_to_ptr.vmem [resolvable:$true] %s1763
      %1766 = dma.vmem_to_hbm [thread:$0]  %s1764, 128, %s6, [#allocation4]
    $region41: #{wavelet_convolution_forward.1} parent=1 // pred_fallthru
      _
    // Predicated region
    $region42: #{wavelet_convolution_forward.1} parent=1 // pred_check
      _
    $region43: #{wavelet_convolution_forward.1} parent=1 // pred_check_branch
      %1768 = sbr.rel (0) target = $region45
    $region44: #{wavelet_convolution_forward.1} parent=1 // pred_region
      %s1770 = ssub.s32 1536, 1536
      %1771 = vsyncadd [#allocation11], %s1770
      %s1772 = sshll.u32 [#allocation10], 4
      %s1773 = int_to_ptr.vmem [resolvable:$true] %s1772
      %1778 = dma.vmem_to_hbm [thread:$0]  %s1773, 1536, %s7, [#allocation11], 256, 256, 16
    $region45: #{wavelet_convolution_forward.1} parent=1 // pred_fallthru
      _
    // Predicated region
    $region46: #{wavelet_convolution_forward.1} parent=1 // pred_check
      _
    $region47: #{wavelet_convolution_forward.1} parent=1 // pred_check_branch
      %1780 = sbr.rel (0) target = $region49
    $region48: #{wavelet_convolution_forward.1} parent=1 // pred_region
      %1781 = dma.done [#allocation4], 128
    $region49: #{wavelet_convolution_forward.1} parent=1 // pred_fallthru
      _
    // Predicated region
    $region50: #{wavelet_convolution_forward.1} parent=1 // pred_check
      _
    $region51: #{wavelet_convolution_forward.1} parent=1 // pred_check_branch
      %1783 = sbr.rel (0) target = $region53
    $region52: #{wavelet_convolution_forward.1} parent=1 // pred_region
      %1784 = dma.done [#allocation11], 1536
    $region53: #{wavelet_convolution_forward.1} parent=1 // pred_fallthru
      _
    %1785 = vsyncpa [#allocation4], 1
    %1786 = vsyncpa [#allocation11], 1
    %1787 = vsyncpa [#allocation5], 1
    %1788 = vsyncpa [#allocation7], 1

</llo_original>
